<compile_context>
chip_gen: v6e
topology: v6e:2x2x1
jax: 0.10.0
libtpu: 0.0.40
codegen_flags: <defaults>
</compile_context>

<pallas_src>
from functools import partial

import numpy as np
import jax
import jax.numpy as jnp
from jax.experimental import pallas as pl
from jax.experimental.pallas import tpu as pltpu

NEG_SLOPE = 0.01  # nn.LeakyReLU default negative_slope
LANE = 128        # per-layer column/row alignment inside the packed slabs


def _leaky(x):
    return jnp.where(x > 0, x, NEG_SLOPE * x)


def _mgcn_value_kernel(n_steps, n_switches, x_ref, adj_ref, w_ref, b_ref,
                       out_ref):
    f32 = jnp.float32

    def lin(v, i):
        # Slice the slab Refs lazily (loaded right before use, 128x128 tile).
        off = i * LANE
        w = w_ref[:, off:off + LANE]            # [128, 128]
        b = b_ref[:, off:off + LANE]            # [1, 128]
        return jnp.dot(v, w, preferred_element_type=f32) + b

    def fcn2(v, i0, i1):
        # FullyConnectNN with one hidden layer: Linear -> LeakyReLU -> Linear
        return lin(_leaky(lin(v, i0)), i1)

    x = x_ref[...]                               # [N, 128] (zero-padded lanes)
    # Fused adjacency reduction: a couple of VPU adds, hidden under the MXU
    # dependency chain.
    a_sum = jnp.sum(adj_ref[...], axis=0)        # [N, N]

    # --- MGCN -------------------------------------------------------------
    # TODO(synk): MGCN / FullyConnectNN sources were not provided with the
    # module; reconstructed as the standard form: prep MLP -> n_steps of
    # residual message passing (shared message MLP, aggregated over all
    # adjacency matrices) -> output MLP.
    h = fcn2(x, 0, 1)                            # prep MLP       [N, 128]
    for _ in range(n_steps):                     # n_steps is tiny; unrolled
        msg = fcn2(h, 2, 3)                      # message MLP    [N, 128]
        # sum_a(A_a @ msg) == (sum_a A_a) @ msg -> one MXU push per step
        h = h + jnp.dot(a_sum, msg, preferred_element_type=f32)
    gcn_out = fcn2(h, 4, 5)                      # output MLP     [N, 128]

    # --- switch head --------------------------------------------------------
    # gather(0, switch_idx) selects rows 0..n_switches-1; since f_gcn_out is
    # row-wise we compute it on all N rows and mask before the sum-pool.
    s = _leaky(lin(gcn_out, 6))
    s = _leaky(lin(s, 7))
    s = lin(s, 8)                                # [N, 128]
    row = jax.lax.broadcasted_iota(jnp.int32, s.shape, 0)
    s = jnp.where(row < n_switches, s, 0.0)
    pooled = jnp.sum(s, axis=0, keepdims=True)   # [1, 128]

    v = _leaky(lin(pooled, 9))                   # g_gcn_out hidden
    out_ref[...] = lin(v, 10)                    # [1, 128]; scalar at [0, 0]


def pack_params(params):
    """Pack all (W, b) pairs into 128-aligned slabs. Runs ONCE, in numpy."""
    n_layers = len(params)
    w_slab = np.zeros((LANE, n_layers * LANE), np.float32)
    b_slab = np.zeros((1, n_layers * LANE), np.float32)
    for i, (w, b) in enumerate(params):
        w = np.asarray(w, np.float32)
        b = np.asarray(b, np.float32).reshape(1, -1)
        fi, fo = w.shape
        assert fi <= LANE and fo <= LANE, "layer exceeds 128-lane packing"
        w_slab[:fi, i * LANE:i * LANE + fo] = w
        b_slab[:, i * LANE:i * LANE + fo] = b
    return jnp.asarray(w_slab), jnp.asarray(b_slab)


def mgcn_value_forward(node_feats, adj_mats, w_slab, b_slab, *,
                       n_steps, n_switches):
    """node_feats [N, n_feats], adj_mats [n_adj, N, N], pre-packed slabs."""
    n_nodes, n_feats = node_feats.shape
    assert n_feats <= LANE
    # Single host-side pad to 128 lanes; zero columns keep the math exact.
    x_pad = jnp.pad(node_feats.astype(jnp.float32),
                    ((0, 0), (0, LANE - n_feats)))
    adj = adj_mats.astype(jnp.float32)

    # Advisory cost estimate (padded-shape dots).
    mlp_dots = 2 + 2 * n_steps + 2 + 3           # dots on [N, 128] activations
    flops = (2 * n_nodes * LANE * LANE * mlp_dots
             + 2 * n_steps * n_nodes * n_nodes * LANE
             + 2 * 2 * LANE * LANE)              # g_gcn_out on the pooled row
    bytes_accessed = 4 * (x_pad.size + adj.size + w_slab.size
                          + b_slab.size + LANE)
    cost = pl.CostEstimate(flops=flops, transcendentals=0,
                           bytes_accessed=bytes_accessed)

    kernel = partial(_mgcn_value_kernel, n_steps, n_switches)
    vspec = pl.BlockSpec(memory_space=pltpu.MemorySpace.VMEM)
    out = pl.pallas_call(
        kernel,
        out_shape=jax.ShapeDtypeStruct((1, LANE), jnp.float32),
        in_specs=[vspec] * 4,
        out_specs=vspec,
        compiler_params=pltpu.CompilerParams(
            vmem_limit_bytes=4 * 1024 * 1024),   # sub-MiB footprint; v7x-safe
        cost_estimate=cost,
    )(x_pad, adj, w_slab, b_slab)
    return out[0, :1]  # matches torch output shape [1]


def init_params(key, n_feats, n_output, n_hid, h_size):
    """Deterministic PyTorch-Linear-style init (uniform +-1/sqrt(fan_in))."""
    sizes = [
        (n_feats, n_hid), (n_hid, h_size),          # MGCN prep MLP
        (h_size, n_hid), (n_hid, h_size),           # MGCN message MLP
        (h_size, n_hid), (n_hid, n_output),         # MGCN output MLP
        (n_output, 16), (16, 16), (16, n_output),   # f_gcn_out
        (n_output, 16), (16, 1),                    # g_gcn_out
    ]
    params = []
    for fan_in, fan_out in sizes:
        key, kw, kb = jax.random.split(key, 3)
        bound = 1.0 / float(fan_in) ** 0.5
        w = jax.random.uniform(kw, (fan_in, fan_out), jnp.float32, -bound, bound)
        b = jax.random.uniform(kb, (1, fan_out), jnp.float32, -bound, bound)
        params.append((w, b))
    return params


def _reference_forward(node_feats, adj_mats, params, *, n_steps, n_switches):
    """Pure-JAX reference (same reconstructed MGCN structure)."""
    def lin(v, p):
        w, b = p
        return v @ w + b

    def fcn2(v, p0, p1):
        return lin(_leaky(lin(v, p0)), p1)

    x = node_feats.astype(jnp.float32)
    a_sum = jnp.sum(adj_mats.astype(jnp.float32), axis=0)
    h = fcn2(x, params[0], params[1])
    for _ in range(n_steps):
        msg = fcn2(h, params[2], params[3])
        h = h + a_sum @ msg
    gcn_out = fcn2(h, params[4], params[5])
    s = gcn_out[:n_switches, :]
    s = _leaky(lin(s, params[6]))
    s = _leaky(lin(s, params[7]))
    s = lin(s, params[8])
    pooled = jnp.sum(s, axis=0, keepdims=True)
    v = _leaky(lin(pooled, params[9]))
    return lin(v, params[10]).reshape(1)


if __name__ == "__main__":
    # Small shapes consistent with the module's forward.
    N_NODES, N_FEATS = 8, 8
    N_SWITCHES, N_OUTPUT = 4, 8
    N_HID, H_SIZE = 32, 32          # n_hids=[32], h_size=32
    N_STEPS, N_ADJ = 2, 2

    key = jax.random.PRNGKey(0)
    key, kx, ka = jax.random.split(key, 3)
    node_feats = jax.random.normal(kx, (N_NODES, N_FEATS), jnp.float32)
    adj_mats = jax.random.uniform(ka, (N_ADJ, N_NODES, N_NODES), jnp.float32)
    params = init_params(key, N_FEATS, N_OUTPUT, N_HID, H_SIZE)

    # Pack once, OUTSIDE the forward path.
    w_slab, b_slab = pack_params(params)

    out = mgcn_value_forward(node_feats, adj_mats, w_slab, b_slab,
                             n_steps=N_STEPS, n_switches=N_SWITCHES)
    jax.block_until_ready(out)
    assert out.shape == (1,) and out.dtype == jnp.float32

    ref = _reference_forward(node_feats, adj_mats, params,
                             n_steps=N_STEPS, n_switches=N_SWITCHES)
    assert jnp.allclose(out, ref, rtol=1e-3, atol=1e-3)
    print("KERNEL_OK")
</pallas_src>

<mosaic_0001>
module attributes {stable_mosaic.version = 11 : i64} {
  func.func @_mgcn_value_kernel(%arg0: memref<8x128xf32, #tpu.memory_space<vmem>>, %arg1: memref<2x8x8xf32, #tpu.memory_space<vmem>>, %arg2: memref<128x1408xf32, #tpu.memory_space<vmem>>, %arg3: memref<1x1408xf32, #tpu.memory_space<vmem>>, %arg4: memref<1x128xf32, #tpu.memory_space<vmem>>) attributes {dimension_semantics = [], scalar_prefetch = 0 : i64, scratch_operands = 0 : i64, tpu.core_type = #tpu.core_type<tc>} {
    %c0 = arith.constant 0 : index
    %c0_0 = arith.constant 0 : index
    %0 = vector.load %arg0[%c0, %c0_0] : memref<8x128xf32, #tpu.memory_space<vmem>>, vector<8x128xf32>
    %c0_1 = arith.constant 0 : index
    %c0_2 = arith.constant 0 : index
    %c0_3 = arith.constant 0 : index
    %1 = vector.load %arg1[%c0_1, %c0_2, %c0_3] : memref<2x8x8xf32, #tpu.memory_space<vmem>>, vector<2x8x8xf32>
    %cst = arith.constant dense<0.000000e+00> : vector<8x8xf32>
    %2 = vector.multi_reduction <add>, %1, %cst [0] : vector<2x8x8xf32> to vector<8x8xf32>
    %c0_4 = arith.constant 0 : index
    %c0_5 = arith.constant 0 : index
    %3 = vector.load %arg2[%c0_4, %c0_5] : memref<128x1408xf32, #tpu.memory_space<vmem>>, vector<128x128xf32>
    %c0_6 = arith.constant 0 : index
    %c0_7 = arith.constant 0 : index
    %4 = vector.load %arg3[%c0_6, %c0_7] : memref<1x1408xf32, #tpu.memory_space<vmem>>, vector<1x128xf32>
    %cst_8 = arith.constant dense<0.000000e+00> : vector<8x128xf32>
    %5 = tpu.matmul %0, %3, %cst_8 {dimension_numbers = #tpu.dot_dimension_numbers<[1], [0], [0], [1], [0, 0, 1, 1], [], []>} : vector<8x128xf32>, vector<128x128xf32>, vector<8x128xf32> -> vector<8x128xf32>
    %6 = vector.broadcast %4 : vector<1x128xf32> to vector<8x128xf32>
    %7 = arith.addf %5, %6 : vector<8x128xf32>
    %cst_9 = arith.constant 0.000000e+00 : f32
    %8 = vector.broadcast %cst_9 : f32 to vector<8x128xf32>
    %9 = arith.cmpf ogt, %7, %8 : vector<8x128xf32>
    %cst_10 = arith.constant 0.00999999977 : f32
    %10 = vector.broadcast %cst_10 : f32 to vector<8x128xf32>
    %11 = arith.mulf %10, %7 : vector<8x128xf32>
    %12 = arith.select %9, %7, %11 : vector<8x128xi1>, vector<8x128xf32>
    %c0_11 = arith.constant 0 : index
    %c128 = arith.constant 128 : index
    %13 = vector.load %arg2[%c0_11, %c128] : memref<128x1408xf32, #tpu.memory_space<vmem>>, vector<128x128xf32>
    %c0_12 = arith.constant 0 : index
    %c128_13 = arith.constant 128 : index
    %14 = vector.load %arg3[%c0_12, %c128_13] : memref<1x1408xf32, #tpu.memory_space<vmem>>, vector<1x128xf32>
    %cst_14 = arith.constant dense<0.000000e+00> : vector<8x128xf32>
    %15 = tpu.matmul %12, %13, %cst_14 {dimension_numbers = #tpu.dot_dimension_numbers<[1], [0], [0], [1], [0, 0, 1, 1], [], []>} : vector<8x128xf32>, vector<128x128xf32>, vector<8x128xf32> -> vector<8x128xf32>
    %16 = vector.broadcast %14 : vector<1x128xf32> to vector<8x128xf32>
    %17 = arith.addf %15, %16 : vector<8x128xf32>
    %c0_15 = arith.constant 0 : index
    %c256 = arith.constant 256 : index
    %18 = vector.load %arg2[%c0_15, %c256] : memref<128x1408xf32, #tpu.memory_space<vmem>>, vector<128x128xf32>
    %c0_16 = arith.constant 0 : index
    %c256_17 = arith.constant 256 : index
    %19 = vector.load %arg3[%c0_16, %c256_17] : memref<1x1408xf32, #tpu.memory_space<vmem>>, vector<1x128xf32>
    %cst_18 = arith.constant dense<0.000000e+00> : vector<8x128xf32>
    %20 = tpu.matmul %17, %18, %cst_18 {dimension_numbers = #tpu.dot_dimension_numbers<[1], [0], [0], [1], [0, 0, 1, 1], [], []>} : vector<8x128xf32>, vector<128x128xf32>, vector<8x128xf32> -> vector<8x128xf32>
    %21 = vector.broadcast %19 : vector<1x128xf32> to vector<8x128xf32>
    %22 = arith.addf %20, %21 : vector<8x128xf32>
    %cst_19 = arith.constant 0.000000e+00 : f32
    %23 = vector.broadcast %cst_19 : f32 to vector<8x128xf32>
    %24 = arith.cmpf ogt, %22, %23 : vector<8x128xf32>
    %cst_20 = arith.constant 0.00999999977 : f32
    %25 = vector.broadcast %cst_20 : f32 to vector<8x128xf32>
    %26 = arith.mulf %25, %22 : vector<8x128xf32>
    %27 = arith.select %24, %22, %26 : vector<8x128xi1>, vector<8x128xf32>
    %c0_21 = arith.constant 0 : index
    %c384 = arith.constant 384 : index
    %28 = vector.load %arg2[%c0_21, %c384] : memref<128x1408xf32, #tpu.memory_space<vmem>>, vector<128x128xf32>
    %c0_22 = arith.constant 0 : index
    %c384_23 = arith.constant 384 : index
    %29 = vector.load %arg3[%c0_22, %c384_23] : memref<1x1408xf32, #tpu.memory_space<vmem>>, vector<1x128xf32>
    %cst_24 = arith.constant dense<0.000000e+00> : vector<8x128xf32>
    %30 = tpu.matmul %27, %28, %cst_24 {dimension_numbers = #tpu.dot_dimension_numbers<[1], [0], [0], [1], [0, 0, 1, 1], [], []>} : vector<8x128xf32>, vector<128x128xf32>, vector<8x128xf32> -> vector<8x128xf32>
    %31 = vector.broadcast %29 : vector<1x128xf32> to vector<8x128xf32>
    %32 = arith.addf %30, %31 : vector<8x128xf32>
    %cst_25 = arith.constant dense<0.000000e+00> : vector<8x128xf32>
    %33 = tpu.matmul %2, %32, %cst_25 {dimension_numbers = #tpu.dot_dimension_numbers<[1], [0], [0], [1], [0, 0, 1, 1], [], []>} : vector<8x8xf32>, vector<8x128xf32>, vector<8x128xf32> -> vector<8x128xf32>
    %34 = arith.addf %17, %33 : vector<8x128xf32>
    %c0_26 = arith.constant 0 : index
    %c256_27 = arith.constant 256 : index
    %35 = vector.load %arg2[%c0_26, %c256_27] : memref<128x1408xf32, #tpu.memory_space<vmem>>, vector<128x128xf32>
    %c0_28 = arith.constant 0 : index
    %c256_29 = arith.constant 256 : index
    %36 = vector.load %arg3[%c0_28, %c256_29] : memref<1x1408xf32, #tpu.memory_space<vmem>>, vector<1x128xf32>
    %cst_30 = arith.constant dense<0.000000e+00> : vector<8x128xf32>
    %37 = tpu.matmul %34, %35, %cst_30 {dimension_numbers = #tpu.dot_dimension_numbers<[1], [0], [0], [1], [0, 0, 1, 1], [], []>} : vector<8x128xf32>, vector<128x128xf32>, vector<8x128xf32> -> vector<8x128xf32>
    %38 = vector.broadcast %36 : vector<1x128xf32> to vector<8x128xf32>
    %39 = arith.addf %37, %38 : vector<8x128xf32>
    %cst_31 = arith.constant 0.000000e+00 : f32
    %40 = vector.broadcast %cst_31 : f32 to vector<8x128xf32>
    %41 = arith.cmpf ogt, %39, %40 : vector<8x128xf32>
    %cst_32 = arith.constant 0.00999999977 : f32
    %42 = vector.broadcast %cst_32 : f32 to vector<8x128xf32>
    %43 = arith.mulf %42, %39 : vector<8x128xf32>
    %44 = arith.select %41, %39, %43 : vector<8x128xi1>, vector<8x128xf32>
    %c0_33 = arith.constant 0 : index
    %c384_34 = arith.constant 384 : index
    %45 = vector.load %arg2[%c0_33, %c384_34] : memref<128x1408xf32, #tpu.memory_space<vmem>>, vector<128x128xf32>
    %c0_35 = arith.constant 0 : index
    %c384_36 = arith.constant 384 : index
    %46 = vector.load %arg3[%c0_35, %c384_36] : memref<1x1408xf32, #tpu.memory_space<vmem>>, vector<1x128xf32>
    %cst_37 = arith.constant dense<0.000000e+00> : vector<8x128xf32>
    %47 = tpu.matmul %44, %45, %cst_37 {dimension_numbers = #tpu.dot_dimension_numbers<[1], [0], [0], [1], [0, 0, 1, 1], [], []>} : vector<8x128xf32>, vector<128x128xf32>, vector<8x128xf32> -> vector<8x128xf32>
    %48 = vector.broadcast %46 : vector<1x128xf32> to vector<8x128xf32>
    %49 = arith.addf %47, %48 : vector<8x128xf32>
    %cst_38 = arith.constant dense<0.000000e+00> : vector<8x128xf32>
    %50 = tpu.matmul %2, %49, %cst_38 {dimension_numbers = #tpu.dot_dimension_numbers<[1], [0], [0], [1], [0, 0, 1, 1], [], []>} : vector<8x8xf32>, vector<8x128xf32>, vector<8x128xf32> -> vector<8x128xf32>
    %51 = arith.addf %34, %50 : vector<8x128xf32>
    %c0_39 = arith.constant 0 : index
    %c512 = arith.constant 512 : index
    %52 = vector.load %arg2[%c0_39, %c512] : memref<128x1408xf32, #tpu.memory_space<vmem>>, vector<128x128xf32>
    %c0_40 = arith.constant 0 : index
    %c512_41 = arith.constant 512 : index
    %53 = vector.load %arg3[%c0_40, %c512_41] : memref<1x1408xf32, #tpu.memory_space<vmem>>, vector<1x128xf32>
    %cst_42 = arith.constant dense<0.000000e+00> : vector<8x128xf32>
    %54 = tpu.matmul %51, %52, %cst_42 {dimension_numbers = #tpu.dot_dimension_numbers<[1], [0], [0], [1], [0, 0, 1, 1], [], []>} : vector<8x128xf32>, vector<128x128xf32>, vector<8x128xf32> -> vector<8x128xf32>
    %55 = vector.broadcast %53 : vector<1x128xf32> to vector<8x128xf32>
    %56 = arith.addf %54, %55 : vector<8x128xf32>
    %cst_43 = arith.constant 0.000000e+00 : f32
    %57 = vector.broadcast %cst_43 : f32 to vector<8x128xf32>
    %58 = arith.cmpf ogt, %56, %57 : vector<8x128xf32>
    %cst_44 = arith.constant 0.00999999977 : f32
    %59 = vector.broadcast %cst_44 : f32 to vector<8x128xf32>
    %60 = arith.mulf %59, %56 : vector<8x128xf32>
    %61 = arith.select %58, %56, %60 : vector<8x128xi1>, vector<8x128xf32>
    %c0_45 = arith.constant 0 : index
    %c640 = arith.constant 640 : index
    %62 = vector.load %arg2[%c0_45, %c640] : memref<128x1408xf32, #tpu.memory_space<vmem>>, vector<128x128xf32>
    %c0_46 = arith.constant 0 : index
    %c640_47 = arith.constant 640 : index
    %63 = vector.load %arg3[%c0_46, %c640_47] : memref<1x1408xf32, #tpu.memory_space<vmem>>, vector<1x128xf32>
    %cst_48 = arith.constant dense<0.000000e+00> : vector<8x128xf32>
    %64 = tpu.matmul %61, %62, %cst_48 {dimension_numbers = #tpu.dot_dimension_numbers<[1], [0], [0], [1], [0, 0, 1, 1], [], []>} : vector<8x128xf32>, vector<128x128xf32>, vector<8x128xf32> -> vector<8x128xf32>
    %65 = vector.broadcast %63 : vector<1x128xf32> to vector<8x128xf32>
    %66 = arith.addf %64, %65 : vector<8x128xf32>
    %c0_49 = arith.constant 0 : index
    %c768 = arith.constant 768 : index
    %67 = vector.load %arg2[%c0_49, %c768] : memref<128x1408xf32, #tpu.memory_space<vmem>>, vector<128x128xf32>
    %c0_50 = arith.constant 0 : index
    %c768_51 = arith.constant 768 : index
    %68 = vector.load %arg3[%c0_50, %c768_51] : memref<1x1408xf32, #tpu.memory_space<vmem>>, vector<1x128xf32>
    %cst_52 = arith.constant dense<0.000000e+00> : vector<8x128xf32>
    %69 = tpu.matmul %66, %67, %cst_52 {dimension_numbers = #tpu.dot_dimension_numbers<[1], [0], [0], [1], [0, 0, 1, 1], [], []>} : vector<8x128xf32>, vector<128x128xf32>, vector<8x128xf32> -> vector<8x128xf32>
    %70 = vector.broadcast %68 : vector<1x128xf32> to vector<8x128xf32>
    %71 = arith.addf %69, %70 : vector<8x128xf32>
    %cst_53 = arith.constant 0.000000e+00 : f32
    %72 = vector.broadcast %cst_53 : f32 to vector<8x128xf32>
    %73 = arith.cmpf ogt, %71, %72 : vector<8x128xf32>
    %cst_54 = arith.constant 0.00999999977 : f32
    %74 = vector.broadcast %cst_54 : f32 to vector<8x128xf32>
    %75 = arith.mulf %74, %71 : vector<8x128xf32>
    %76 = arith.select %73, %71, %75 : vector<8x128xi1>, vector<8x128xf32>
    %c0_55 = arith.constant 0 : index
    %c896 = arith.constant 896 : index
    %77 = vector.load %arg2[%c0_55, %c896] : memref<128x1408xf32, #tpu.memory_space<vmem>>, vector<128x128xf32>
    %c0_56 = arith.constant 0 : index
    %c896_57 = arith.constant 896 : index
    %78 = vector.load %arg3[%c0_56, %c896_57] : memref<1x1408xf32, #tpu.memory_space<vmem>>, vector<1x128xf32>
    %cst_58 = arith.constant dense<0.000000e+00> : vector<8x128xf32>
    %79 = tpu.matmul %76, %77, %cst_58 {dimension_numbers = #tpu.dot_dimension_numbers<[1], [0], [0], [1], [0, 0, 1, 1], [], []>} : vector<8x128xf32>, vector<128x128xf32>, vector<8x128xf32> -> vector<8x128xf32>
    %80 = vector.broadcast %78 : vector<1x128xf32> to vector<8x128xf32>
    %81 = arith.addf %79, %80 : vector<8x128xf32>
    %cst_59 = arith.constant 0.000000e+00 : f32
    %82 = vector.broadcast %cst_59 : f32 to vector<8x128xf32>
    %83 = arith.cmpf ogt, %81, %82 : vector<8x128xf32>
    %cst_60 = arith.constant 0.00999999977 : f32
    %84 = vector.broadcast %cst_60 : f32 to vector<8x128xf32>
    %85 = arith.mulf %84, %81 : vector<8x128xf32>
    %86 = arith.select %83, %81, %85 : vector<8x128xi1>, vector<8x128xf32>
    %c0_61 = arith.constant 0 : index
    %c1024 = arith.constant 1024 : index
    %87 = vector.load %arg2[%c0_61, %c1024] : memref<128x1408xf32, #tpu.memory_space<vmem>>, vector<128x128xf32>
    %c0_62 = arith.constant 0 : index
    %c1024_63 = arith.constant 1024 : index
    %88 = vector.load %arg3[%c0_62, %c1024_63] : memref<1x1408xf32, #tpu.memory_space<vmem>>, vector<1x128xf32>
    %cst_64 = arith.constant dense<0.000000e+00> : vector<8x128xf32>
    %89 = tpu.matmul %86, %87, %cst_64 {dimension_numbers = #tpu.dot_dimension_numbers<[1], [0], [0], [1], [0, 0, 1, 1], [], []>} : vector<8x128xf32>, vector<128x128xf32>, vector<8x128xf32> -> vector<8x128xf32>
    %90 = vector.broadcast %88 : vector<1x128xf32> to vector<8x128xf32>
    %91 = arith.addf %89, %90 : vector<8x128xf32>
    %92 = tpu.iota {dimensions = array<i32: 0>} : vector<8x128xi32>
    %c4_i32 = arith.constant 4 : i32
    %93 = vector.broadcast %c4_i32 : i32 to vector<8x128xi32>
    %94 = arith.cmpi slt, %92, %93 : vector<8x128xi32>
    %cst_65 = arith.constant 0.000000e+00 : f32
    %95 = vector.broadcast %cst_65 : f32 to vector<8x128xf32>
    %96 = arith.select %94, %91, %95 : vector<8x128xi1>, vector<8x128xf32>
    %cst_66 = arith.constant dense<0.000000e+00> : vector<128xf32>
    %97 = vector.multi_reduction <add>, %96, %cst_66 [0] : vector<8x128xf32> to vector<128xf32>
    %98 = vector.shape_cast %97 : vector<128xf32> to vector<1x128xf32>
    %c0_67 = arith.constant 0 : index
    %c1152 = arith.constant 1152 : index
    %99 = vector.load %arg2[%c0_67, %c1152] : memref<128x1408xf32, #tpu.memory_space<vmem>>, vector<128x128xf32>
    %c0_68 = arith.constant 0 : index
    %c1152_69 = arith.constant 1152 : index
    %100 = vector.load %arg3[%c0_68, %c1152_69] : memref<1x1408xf32, #tpu.memory_space<vmem>>, vector<1x128xf32>
    %cst_70 = arith.constant dense<0.000000e+00> : vector<1x128xf32>
    %101 = tpu.matmul %98, %99, %cst_70 {dimension_numbers = #tpu.dot_dimension_numbers<[1], [0], [0], [1], [0, 0, 1, 1], [], []>} : vector<1x128xf32>, vector<128x128xf32>, vector<1x128xf32> -> vector<1x128xf32>
    %102 = arith.addf %101, %100 : vector<1x128xf32>
    %cst_71 = arith.constant 0.000000e+00 : f32
    %103 = vector.broadcast %cst_71 : f32 to vector<1x128xf32>
    %104 = arith.cmpf ogt, %102, %103 : vector<1x128xf32>
    %cst_72 = arith.constant 0.00999999977 : f32
    %105 = vector.broadcast %cst_72 : f32 to vector<1x128xf32>
    %106 = arith.mulf %105, %102 : vector<1x128xf32>
    %107 = arith.select %104, %102, %106 : vector<1x128xi1>, vector<1x128xf32>
    %c0_73 = arith.constant 0 : index
    %c1280 = arith.constant 1280 : index
    %108 = vector.load %arg2[%c0_73, %c1280] : memref<128x1408xf32, #tpu.memory_space<vmem>>, vector<128x128xf32>
    %c0_74 = arith.constant 0 : index
    %c1280_75 = arith.constant 1280 : index
    %109 = vector.load %arg3[%c0_74, %c1280_75] : memref<1x1408xf32, #tpu.memory_space<vmem>>, vector<1x128xf32>
    %cst_76 = arith.constant dense<0.000000e+00> : vector<1x128xf32>
    %110 = tpu.matmul %107, %108, %cst_76 {dimension_numbers = #tpu.dot_dimension_numbers<[1], [0], [0], [1], [0, 0, 1, 1], [], []>} : vector<1x128xf32>, vector<128x128xf32>, vector<1x128xf32> -> vector<1x128xf32>
    %111 = arith.addf %110, %109 : vector<1x128xf32>
    %c0_77 = arith.constant 0 : index
    %c0_78 = arith.constant 0 : index
    %112 = vector.load %arg4[%c0_77, %c0_78] : memref<1x128xf32, #tpu.memory_space<vmem>>, vector<1x128xf32>
    tpu.vector_store %arg4[%c0_77, %c0_78], %111 {strides = array<i32>} : memref<1x128xf32, #tpu.memory_space<vmem>>, vector<1x128xf32>,
    return
  }
}

</mosaic_0001>

<llo_original>
// kernel: tpu_custom_call.1
$region0: #{tpu_custom_call.1}
  #allocation0 [shape = 'u32[]', space=smem, size = 0x4, offset = 0x4, fixed_abs, tag = 'smem constant byte address 0x4 - core index']
  #allocation1 [shape = 'u32[144,128]{1,0:T(1,128)}', space=vmem, size = 0x12000, scoped, tag = 'internal scratch']
  %s0 = inlined_call_operand.hbm [shape: f32[8,128], index: 0, kind: input, shape index: {}]
  %s1 = inlined_call_operand.hbm [shape: f32[2,8,8], index: 1, kind: input, shape index: {}]
  %s2 = inlined_call_operand.hbm [shape: f32[128,1408], index: 2, kind: input, shape index: {}]
  %s3 = inlined_call_operand.hbm [shape: f32[1,1408], index: 3, kind: input, shape index: {}]
  %s4 = inlined_call_operand.hbm [shape: f32[1,128], index: 4, kind: output, shape index: {}]
  %s5 = sld [smem:[#allocation0]]
  $region42: #{tpu_custom_call.1} parent=0
    _
  %s7 = ssub.s32 1, %s5
  %s8 = scalar_select 0, %s7, %s5
  $region1: #{tpu_custom_call.1} parent=0
    #allocation2 [shape = 'u8[4096]{0}', space=vmem, size = 0x1000, scoped, tag = 'input window, operand 0, single buffered']
    #allocation3 [shape = 's32[1]{0}', space=sflag, size = 0x4, scoped, tag = 'scoped memory for tpu_custom_call.1']
    #allocation4 [shape = 's32[1]{0}', space=sflag, size = 0x4, scoped, tag = 'scoped memory for tpu_custom_call.1']
    #allocation5 [shape = 'u8[8192]{0}', space=vmem, size = 0x2000, scoped, tag = 'input window, operand 1, single buffered']
    #allocation6 [shape = 's32[1]{0}', space=sflag, size = 0x4, scoped, tag = 'scoped memory for tpu_custom_call.1']
    #allocation7 [shape = 'u8[720896]{0}', space=vmem, size = 0xb0000, scoped, tag = 'input window, operand 2, single buffered']
    #allocation8 [shape = 'u8[5632]{0}', space=vmem, size = 0x1800, scoped, tag = 'input window, operand 3, single buffered']
    #allocation9 [shape = 's32[1]{0}', space=sflag, size = 0x4, scoped, tag = 'scoped memory for tpu_custom_call.1']
    #allocation10 [shape = 'u8[512]{0}', space=vmem, size = 0x400, scoped, tag = 'output window, operand 0, single buffered']
    %9 = vsyncpa [#allocation3], 0
    %10 = vsyncpa [#allocation6], 0
    %11 = vsyncpa [#allocation9], 0
    %12 = vsyncpa [#allocation4], 0
    // Predicated region
    $region2: #{tpu_custom_call.1} parent=1 // pred_check
      _
    $region3: #{tpu_custom_call.1} parent=1 // pred_check_branch
      %14 = sbr.rel (0) target = $region5
    $region4: #{tpu_custom_call.1} parent=1 // pred_region
      %s16 = ssub.s32 128, 128
      %17 = vsyncadd [#allocation3], %s16
      %s19 = sshll.u32 [#allocation2], 4
      %s20 = int_to_ptr.vmem [resolvable:$true] %s19
      %22 = dma.hbm_to_vmem [thread:$0]  %s0, 128, %s20, [#allocation3]
    $region5: #{tpu_custom_call.1} parent=1 // pred_fallthru
      _
    // Predicated region
    $region6: #{tpu_custom_call.1} parent=1 // pred_check
      _
    $region7: #{tpu_custom_call.1} parent=1 // pred_check_branch
      %24 = sbr.rel (0) target = $region9
    $region8: #{tpu_custom_call.1} parent=1 // pred_region
      %s26 = ssub.s32 256, 256
      %27 = vsyncadd [#allocation6], %s26
      %s28 = sshll.u32 [#allocation5], 4
      %s29 = int_to_ptr.vmem [resolvable:$true] %s28
      %34 = dma.hbm_to_vmem [thread:$0]  %s1, 256, %s29, [#allocation6], 128, 128, 8
    $region9: #{tpu_custom_call.1} parent=1 // pred_fallthru
      _
    // Predicated region
    $region10: #{tpu_custom_call.1} parent=1 // pred_check
      _
    $region11: #{tpu_custom_call.1} parent=1 // pred_check_branch
      %36 = sbr.rel (0) target = $region13
    $region12: #{tpu_custom_call.1} parent=1 // pred_region
      %s38 = ssub.s32 22528, 22528
      %39 = vsyncadd [#allocation6], %s38
      %s40 = sshll.u32 [#allocation7], 4
      %s41 = int_to_ptr.vmem [resolvable:$true] %s40
      %46 = dma.hbm_to_vmem [thread:$0]  %s2, 22528, %s41, [#allocation6], 1408, 1408, 88
    $region13: #{tpu_custom_call.1} parent=1 // pred_fallthru
      _
    // Predicated region
    $region14: #{tpu_custom_call.1} parent=1 // pred_check
      _
    $region15: #{tpu_custom_call.1} parent=1 // pred_check_branch
      %48 = sbr.rel (0) target = $region17
    $region16: #{tpu_custom_call.1} parent=1 // pred_region
      %s50 = ssub.s32 176, 176
      %51 = vsyncadd [#allocation9], %s50
      %s53 = sshll.u32 [#allocation8], 4
      %s54 = int_to_ptr.vmem [resolvable:$true] %s53
      %56 = dma.hbm_to_vmem [thread:$0]  %s3, 176, %s54, [#allocation9]
    $region17: #{tpu_custom_call.1} parent=1 // pred_fallthru
      _
    // Predicated region
    $region18: #{tpu_custom_call.1} parent=1 // pred_check
      _
    $region19: #{tpu_custom_call.1} parent=1 // pred_check_branch
      %58 = sbr.rel (0) target = $region21
    $region20: #{tpu_custom_call.1} parent=1 // pred_region
      %59 = dma.done [#allocation3], 128
    $region21: #{tpu_custom_call.1} parent=1 // pred_fallthru
      _
    // Predicated region
    $region22: #{tpu_custom_call.1} parent=1 // pred_check
      _
    $region23: #{tpu_custom_call.1} parent=1 // pred_check_branch
      %61 = sbr.rel (0) target = $region25
    $region24: #{tpu_custom_call.1} parent=1 // pred_region
      %62 = dma.done [#allocation6], 256
    $region25: #{tpu_custom_call.1} parent=1 // pred_fallthru
      _
    // Predicated region
    $region26: #{tpu_custom_call.1} parent=1 // pred_check
      _
    $region27: #{tpu_custom_call.1} parent=1 // pred_check_branch
      %64 = sbr.rel (0) target = $region29
    $region28: #{tpu_custom_call.1} parent=1 // pred_region
      %65 = dma.done [#allocation6], 22528
    $region29: #{tpu_custom_call.1} parent=1 // pred_fallthru
      _
    // Predicated region
    $region30: #{tpu_custom_call.1} parent=1 // pred_check
      _
    $region31: #{tpu_custom_call.1} parent=1 // pred_check_branch
      %67 = sbr.rel (0) target = $region33
    $region32: #{tpu_custom_call.1} parent=1 // pred_region
      %68 = dma.done [#allocation9], 176
    $region33: #{tpu_custom_call.1} parent=1 // pred_fallthru
      _
    %v69 = vld [vmem:[#allocation2] sm:$0xff]
    %v70 = vld [vmem:[#allocation5] sm:$0xff]
    %v71 = vld [vmem:[#allocation5 + $0x8] sm:$0xff]
    %vm72 = vcmask 64512
    %v73 = vsel %vm72, %v70, 0.0
    %v74 = vsel %vm72, %v71, 0.0
    %v75 = vadd.f32 %v73, %v74
    %v76 = vld [vmem:[#allocation7] sm:$0xff]
    %v77 = vld [vmem:[#allocation7 + $0x58] sm:$0xff]
    %v78 = vld [vmem:[#allocation7 + $0xb0] sm:$0xff]
    %v79 = vld [vmem:[#allocation7 + $0x108] sm:$0xff]
    %v80 = vld [vmem:[#allocation7 + $0x160] sm:$0xff]
    %v81 = vld [vmem:[#allocation7 + $0x1b8] sm:$0xff]
    %v82 = vld [vmem:[#allocation7 + $0x210] sm:$0xff]
    %v83 = vld [vmem:[#allocation7 + $0x268] sm:$0xff]
    %v84 = vld [vmem:[#allocation7 + $0x2c0] sm:$0xff]
    %v85 = vld [vmem:[#allocation7 + $0x318] sm:$0xff]
    %v86 = vld [vmem:[#allocation7 + $0x370] sm:$0xff]
    %v87 = vld [vmem:[#allocation7 + $0x3c8] sm:$0xff]
    %v88 = vld [vmem:[#allocation7 + $0x420] sm:$0xff]
    %v89 = vld [vmem:[#allocation7 + $0x478] sm:$0xff]
    %v90 = vld [vmem:[#allocation7 + $0x4d0] sm:$0xff]
    %v91 = vld [vmem:[#allocation7 + $0x528] sm:$0xff]
    %v92 = vld [vmem:[#allocation8] sm:$0x1]
    %v94 = vlaneseq
    %v95 = vshrl.u32 %v94, 7
    %v96 = vsub.s32 0, %v95
    %v97 = vrot.slane %v92, %v96
    %99 = vmatprep.subr.mxu0 0.0
    %100 = vmatpush1.msra.mxu0 %v91
    %101 = vmatprep.subr.mxu0 0.0
    %102 = vmatpush1.msra.mxu0 %v90
    %103 = vmatprep.subr.mxu0 0.0
    %104 = vmatpush1.msra.mxu0 %v89
    %105 = vmatprep.subr.mxu0 0.0
    %106 = vmatpush1.msra.mxu0 %v88
    %107 = vmatprep.subr.mxu0 0.0
    %108 = vmatpush1.msra.mxu0 %v87
    %109 = vmatprep.subr.mxu0 0.0
    %110 = vmatpush1.msra.mxu0 %v86
    %111 = vmatprep.subr.mxu0 0.0
    %112 = vmatpush1.msra.mxu0 %v85
    %113 = vmatprep.subr.mxu0 0.0
    %114 = vmatpush1.msra.mxu0 %v84
    %115 = vmatprep.subr.mxu0 0.0
    %116 = vmatpush1.msra.mxu0 %v83
    %117 = vmatprep.subr.mxu0 0.0
    %118 = vmatpush1.msra.mxu0 %v82
    %119 = vmatprep.subr.mxu0 0.0
    %120 = vmatpush1.msra.mxu0 %v81
    %121 = vmatprep.subr.mxu0 0.0
    %122 = vmatpush1.msra.mxu0 %v80
    %123 = vmatprep.subr.mxu0 0.0
    %124 = vmatpush1.msra.mxu0 %v79
    %125 = vmatprep.subr.mxu0 0.0
    %126 = vmatpush1.msra.mxu0 %v78
    %127 = vmatprep.subr.mxu0 0.0
    %128 = vmatpush1.msra.mxu0 %v77
    %129 = vmatprep.subr.mxu0 0.0
    %130 = vmatpush1.msra.mxu0 %v76
    %131 = vmatprep.subr.mxu0 0.0
    %132 = vmatpush2.msra.mxu0 0.0
    %133 = vmatprep.subr.mxu0 0.0
    %134 = vmatpush2.msra.mxu0 0.0
    %135 = vmatprep.subr.mxu0 0.0
    %136 = vmatpush2.msra.mxu0 0.0
    %137 = vmatprep.subr.mxu0 0.0
    %138 = vmatpush2.msra.mxu0 0.0
    %139 = vmatprep.subr.mxu0 0.0
    %140 = vmatpush2.msra.mxu0 0.0
    %141 = vmatprep.subr.mxu0 0.0
    %142 = vmatpush2.msra.mxu0 0.0
    %143 = vmatprep.subr.mxu0 0.0
    %144 = vmatpush2.msra.mxu0 0.0
    %145 = vmatprep.subr.mxu0 0.0
    %146 = vmatpush2.msra.mxu0 0.0
    %147 = vmatprep.subr.mxu0 0.0
    %148 = vmatpush2.msra.mxu0 0.0
    %149 = vmatprep.subr.mxu0 0.0
    %150 = vmatpush2.msra.mxu0 0.0
    %151 = vmatprep.subr.mxu0 0.0
    %152 = vmatpush2.msra.mxu0 0.0
    %153 = vmatprep.subr.mxu0 0.0
    %154 = vmatpush2.msra.mxu0 0.0
    %155 = vmatprep.subr.mxu0 0.0
    %156 = vmatpush2.msra.mxu0 0.0
    %157 = vmatprep.subr.mxu0 0.0
    %158 = vmatpush2.msra.mxu0 0.0
    %159 = vmatprep.subr.mxu0 0.0
    %160 = vmatpush2.msra.mxu0 0.0
    %161 = vmatprep.subr.mxu0 0.0
    %162 = vmatpush2.msra.mxu0 0.0
    %163 = vmatprep.mubr.f32.mxu0 0.0
    %164 = vmatmul.mubr.f32.gmra.mxu0 %v69
    %v165 = vpop.f32.mrf.mxu0
    %v166 = vadd.f32 %v97, %v165
    %v167 = vpop.f32.mrf.mxu0
    %168 = vdwg.mxu0
    %vm169 = vcmp.gt.f32.partialorder %v166, 0.0
    %v170 = vmul.f32 %v166, 0.01
    %v171 = vsel %vm169, %v166, %v170
    %v172 = vld [vmem:[#allocation7 + $0x8] sm:$0xff]
    %v173 = vld [vmem:[#allocation7 + $0x60] sm:$0xff]
    %v174 = vld [vmem:[#allocation7 + $0xb8] sm:$0xff]
    %v175 = vld [vmem:[#allocation7 + $0x110] sm:$0xff]
    %v176 = vld [vmem:[#allocation7 + $0x168] sm:$0xff]
    %v177 = vld [vmem:[#allocation7 + $0x1c0] sm:$0xff]
    %v178 = vld [vmem:[#allocation7 + $0x218] sm:$0xff]
    %v179 = vld [vmem:[#allocation7 + $0x270] sm:$0xff]
    %v180 = vld [vmem:[#allocation7 + $0x2c8] sm:$0xff]
    %v181 = vld [vmem:[#allocation7 + $0x320] sm:$0xff]
    %v182 = vld [vmem:[#allocation7 + $0x378] sm:$0xff]
    %v183 = vld [vmem:[#allocation7 + $0x3d0] sm:$0xff]
    %v184 = vld [vmem:[#allocation7 + $0x428] sm:$0xff]
    %v185 = vld [vmem:[#allocation7 + $0x480] sm:$0xff]
    %v186 = vld [vmem:[#allocation7 + $0x4d8] sm:$0xff]
    %v187 = vld [vmem:[#allocation7 + $0x530] sm:$0xff]
    %v188 = vld [vmem:[#allocation8 + $0x1] sm:$0x1]
    %v190 = vlaneseq
    %v191 = vshrl.u32 %v190, 7
    %v192 = vsub.s32 0, %v191
    %v193 = vrot.slane %v188, %v192
    %195 = vmatprep.subr.mxu0 0.0
    %196 = vmatpush1.msra.mxu0 %v187
    %197 = vmatprep.subr.mxu0 0.0
    %198 = vmatpush1.msra.mxu0 %v186
    %199 = vmatprep.subr.mxu0 0.0
    %200 = vmatpush1.msra.mxu0 %v185
    %201 = vmatprep.subr.mxu0 0.0
    %202 = vmatpush1.msra.mxu0 %v184
    %203 = vmatprep.subr.mxu0 0.0
    %204 = vmatpush1.msra.mxu0 %v183
    %205 = vmatprep.subr.mxu0 0.0
    %206 = vmatpush1.msra.mxu0 %v182
    %207 = vmatprep.subr.mxu0 0.0
    %208 = vmatpush1.msra.mxu0 %v181
    %209 = vmatprep.subr.mxu0 0.0
    %210 = vmatpush1.msra.mxu0 %v180
    %211 = vmatprep.subr.mxu0 0.0
    %212 = vmatpush1.msra.mxu0 %v179
    %213 = vmatprep.subr.mxu0 0.0
    %214 = vmatpush1.msra.mxu0 %v178
    %215 = vmatprep.subr.mxu0 0.0
    %216 = vmatpush1.msra.mxu0 %v177
    %217 = vmatprep.subr.mxu0 0.0
    %218 = vmatpush1.msra.mxu0 %v176
    %219 = vmatprep.subr.mxu0 0.0
    %220 = vmatpush1.msra.mxu0 %v175
    %221 = vmatprep.subr.mxu0 0.0
    %222 = vmatpush1.msra.mxu0 %v174
    %223 = vmatprep.subr.mxu0 0.0
    %224 = vmatpush1.msra.mxu0 %v173
    %225 = vmatprep.subr.mxu0 0.0
    %226 = vmatpush1.msra.mxu0 %v172
    %227 = vmatprep.subr.mxu0 0.0
    %228 = vmatpush2.msra.mxu0 0.0
    %229 = vmatprep.subr.mxu0 0.0
    %230 = vmatpush2.msra.mxu0 0.0
    %231 = vmatprep.subr.mxu0 0.0
    %232 = vmatpush2.msra.mxu0 0.0
    %233 = vmatprep.subr.mxu0 0.0
    %234 = vmatpush2.msra.mxu0 0.0
    %235 = vmatprep.subr.mxu0 0.0
    %236 = vmatpush2.msra.mxu0 0.0
    %237 = vmatprep.subr.mxu0 0.0
    %238 = vmatpush2.msra.mxu0 0.0
    %239 = vmatprep.subr.mxu0 0.0
    %240 = vmatpush2.msra.mxu0 0.0
    %241 = vmatprep.subr.mxu0 0.0
    %242 = vmatpush2.msra.mxu0 0.0
    %243 = vmatprep.subr.mxu0 0.0
    %244 = vmatpush2.msra.mxu0 0.0
    %245 = vmatprep.subr.mxu0 0.0
    %246 = vmatpush2.msra.mxu0 0.0
    %247 = vmatprep.subr.mxu0 0.0
    %248 = vmatpush2.msra.mxu0 0.0
    %249 = vmatprep.subr.mxu0 0.0
    %250 = vmatpush2.msra.mxu0 0.0
    %251 = vmatprep.subr.mxu0 0.0
    %252 = vmatpush2.msra.mxu0 0.0
    %253 = vmatprep.subr.mxu0 0.0
    %254 = vmatpush2.msra.mxu0 0.0
    %255 = vmatprep.subr.mxu0 0.0
    %256 = vmatpush2.msra.mxu0 0.0
    %257 = vmatprep.subr.mxu0 0.0
    %258 = vmatpush2.msra.mxu0 0.0
    %259 = vmatprep.mubr.f32.mxu0 0.0
    %260 = vmatmul.mubr.f32.gmra.mxu0 %v171
    %v261 = vpop.f32.mrf.mxu0
    %v262 = vadd.f32 %v193, %v261
    %v263 = vpop.f32.mrf.mxu0
    %264 = vdwg.mxu0
    %v265 = vld [vmem:[#allocation7 + $0x10] sm:$0xff]
    %v266 = vld [vmem:[#allocation7 + $0x68] sm:$0xff]
    %v267 = vld [vmem:[#allocation7 + $0xc0] sm:$0xff]
    %v268 = vld [vmem:[#allocation7 + $0x118] sm:$0xff]
    %v269 = vld [vmem:[#allocation7 + $0x170] sm:$0xff]
    %v270 = vld [vmem:[#allocation7 + $0x1c8] sm:$0xff]
    %v271 = vld [vmem:[#allocation7 + $0x220] sm:$0xff]
    %v272 = vld [vmem:[#allocation7 + $0x278] sm:$0xff]
    %v273 = vld [vmem:[#allocation7 + $0x2d0] sm:$0xff]
    %v274 = vld [vmem:[#allocation7 + $0x328] sm:$0xff]
    %v275 = vld [vmem:[#allocation7 + $0x380] sm:$0xff]
    %v276 = vld [vmem:[#allocation7 + $0x3d8] sm:$0xff]
    %v277 = vld [vmem:[#allocation7 + $0x430] sm:$0xff]
    %v278 = vld [vmem:[#allocation7 + $0x488] sm:$0xff]
    %v279 = vld [vmem:[#allocation7 + $0x4e0] sm:$0xff]
    %v280 = vld [vmem:[#allocation7 + $0x538] sm:$0xff]
    %v281 = vld [vmem:[#allocation8 + $0x2] sm:$0x1]
    %v283 = vlaneseq
    %v284 = vshrl.u32 %v283, 7
    %v285 = vsub.s32 0, %v284
    %v286 = vrot.slane %v281, %v285
    %288 = vmatprep.subr.mxu0 0.0
    %289 = vmatpush1.msra.mxu0 %v280
    %290 = vmatprep.subr.mxu0 0.0
    %291 = vmatpush1.msra.mxu0 %v279
    %292 = vmatprep.subr.mxu0 0.0
    %293 = vmatpush1.msra.mxu0 %v278
    %294 = vmatprep.subr.mxu0 0.0
    %295 = vmatpush1.msra.mxu0 %v277
    %296 = vmatprep.subr.mxu0 0.0
    %297 = vmatpush1.msra.mxu0 %v276
    %298 = vmatprep.subr.mxu0 0.0
    %299 = vmatpush1.msra.mxu0 %v275
    %300 = vmatprep.subr.mxu0 0.0
    %301 = vmatpush1.msra.mxu0 %v274
    %302 = vmatprep.subr.mxu0 0.0
    %303 = vmatpush1.msra.mxu0 %v273
    %304 = vmatprep.subr.mxu0 0.0
    %305 = vmatpush1.msra.mxu0 %v272
    %306 = vmatprep.subr.mxu0 0.0
    %307 = vmatpush1.msra.mxu0 %v271
    %308 = vmatprep.subr.mxu0 0.0
    %309 = vmatpush1.msra.mxu0 %v270
    %310 = vmatprep.subr.mxu0 0.0
    %311 = vmatpush1.msra.mxu0 %v269
    %312 = vmatprep.subr.mxu0 0.0
    %313 = vmatpush1.msra.mxu0 %v268
    %314 = vmatprep.subr.mxu0 0.0
    %315 = vmatpush1.msra.mxu0 %v267
    %316 = vmatprep.subr.mxu0 0.0
    %317 = vmatpush1.msra.mxu0 %v266
    %318 = vmatprep.subr.mxu0 0.0
    %319 = vmatpush1.msra.mxu0 %v265
    %320 = vmatprep.subr.mxu0 0.0
    %321 = vmatpush2.msra.mxu0 0.0
    %322 = vmatprep.subr.mxu0 0.0
    %323 = vmatpush2.msra.mxu0 0.0
    %324 = vmatprep.subr.mxu0 0.0
    %325 = vmatpush2.msra.mxu0 0.0
    %326 = vmatprep.subr.mxu0 0.0
    %327 = vmatpush2.msra.mxu0 0.0
    %328 = vmatprep.subr.mxu0 0.0
    %329 = vmatpush2.msra.mxu0 0.0
    %330 = vmatprep.subr.mxu0 0.0
    %331 = vmatpush2.msra.mxu0 0.0
    %332 = vmatprep.subr.mxu0 0.0
    %333 = vmatpush2.msra.mxu0 0.0
    %334 = vmatprep.subr.mxu0 0.0
    %335 = vmatpush2.msra.mxu0 0.0
    %336 = vmatprep.subr.mxu0 0.0
    %337 = vmatpush2.msra.mxu0 0.0
    %338 = vmatprep.subr.mxu0 0.0
    %339 = vmatpush2.msra.mxu0 0.0
    %340 = vmatprep.subr.mxu0 0.0
    %341 = vmatpush2.msra.mxu0 0.0
    %342 = vmatprep.subr.mxu0 0.0
    %343 = vmatpush2.msra.mxu0 0.0
    %344 = vmatprep.subr.mxu0 0.0
    %345 = vmatpush2.msra.mxu0 0.0
    %346 = vmatprep.subr.mxu0 0.0
    %347 = vmatpush2.msra.mxu0 0.0
    %348 = vmatprep.subr.mxu0 0.0
    %349 = vmatpush2.msra.mxu0 0.0
    %350 = vmatprep.subr.mxu0 0.0
    %351 = vmatpush2.msra.mxu0 0.0
    %352 = vmatprep.mubr.f32.mxu0 0.0
    %353 = vmatmul.mubr.f32.gmra.mxu0 %v262
    %v354 = vpop.f32.mrf.mxu0
    %v355 = vadd.f32 %v286, %v354
    %v356 = vpop.f32.mrf.mxu0
    %357 = vdwg.mxu0
    %vm358 = vcmp.gt.f32.partialorder %v355, 0.0
    %v359 = vmul.f32 %v355, 0.01
    %v360 = vsel %vm358, %v355, %v359
    %v361 = vld [vmem:[#allocation7 + $0x18] sm:$0xff]
    %v362 = vld [vmem:[#allocation7 + $0x70] sm:$0xff]
    %v363 = vld [vmem:[#allocation7 + $0xc8] sm:$0xff]
    %v364 = vld [vmem:[#allocation7 + $0x120] sm:$0xff]
    %v365 = vld [vmem:[#allocation7 + $0x178] sm:$0xff]
    %v366 = vld [vmem:[#allocation7 + $0x1d0] sm:$0xff]
    %v367 = vld [vmem:[#allocation7 + $0x228] sm:$0xff]
    %v368 = vld [vmem:[#allocation7 + $0x280] sm:$0xff]
    %v369 = vld [vmem:[#allocation7 + $0x2d8] sm:$0xff]
    %v370 = vld [vmem:[#allocation7 + $0x330] sm:$0xff]
    %v371 = vld [vmem:[#allocation7 + $0x388] sm:$0xff]
    %v372 = vld [vmem:[#allocation7 + $0x3e0] sm:$0xff]
    %v373 = vld [vmem:[#allocation7 + $0x438] sm:$0xff]
    %v374 = vld [vmem:[#allocation7 + $0x490] sm:$0xff]
    %v375 = vld [vmem:[#allocation7 + $0x4e8] sm:$0xff]
    %v376 = vld [vmem:[#allocation7 + $0x540] sm:$0xff]
    %v377 = vld [vmem:[#allocation8 + $0x3] sm:$0x1]
    %v379 = vlaneseq
    %v380 = vshrl.u32 %v379, 7
    %v381 = vsub.s32 0, %v380
    %v382 = vrot.slane %v377, %v381
    %384 = vmatprep.subr.mxu0 0.0
    %385 = vmatpush1.msra.mxu0 %v376
    %386 = vmatprep.subr.mxu0 0.0
    %387 = vmatpush1.msra.mxu0 %v375
    %388 = vmatprep.subr.mxu0 0.0
    %389 = vmatpush1.msra.mxu0 %v374
    %390 = vmatprep.subr.mxu0 0.0
    %391 = vmatpush1.msra.mxu0 %v373
    %392 = vmatprep.subr.mxu0 0.0
    %393 = vmatpush1.msra.mxu0 %v372
    %394 = vmatprep.subr.mxu0 0.0
    %395 = vmatpush1.msra.mxu0 %v371
    %396 = vmatprep.subr.mxu0 0.0
    %397 = vmatpush1.msra.mxu0 %v370
    %398 = vmatprep.subr.mxu0 0.0
    %399 = vmatpush1.msra.mxu0 %v369
    %400 = vmatprep.subr.mxu0 0.0
    %401 = vmatpush1.msra.mxu0 %v368
    %402 = vmatprep.subr.mxu0 0.0
    %403 = vmatpush1.msra.mxu0 %v367
    %404 = vmatprep.subr.mxu0 0.0
    %405 = vmatpush1.msra.mxu0 %v366
    %406 = vmatprep.subr.mxu0 0.0
    %407 = vmatpush1.msra.mxu0 %v365
    %408 = vmatprep.subr.mxu0 0.0
    %409 = vmatpush1.msra.mxu0 %v364
    %410 = vmatprep.subr.mxu0 0.0
    %411 = vmatpush1.msra.mxu0 %v363
    %412 = vmatprep.subr.mxu0 0.0
    %413 = vmatpush1.msra.mxu0 %v362
    %414 = vmatprep.subr.mxu0 0.0
    %415 = vmatpush1.msra.mxu0 %v361
    %416 = vmatprep.subr.mxu0 0.0
    %417 = vmatpush2.msra.mxu0 0.0
    %418 = vmatprep.subr.mxu0 0.0
    %419 = vmatpush2.msra.mxu0 0.0
    %420 = vmatprep.subr.mxu0 0.0
    %421 = vmatpush2.msra.mxu0 0.0
    %422 = vmatprep.subr.mxu0 0.0
    %423 = vmatpush2.msra.mxu0 0.0
    %424 = vmatprep.subr.mxu0 0.0
    %425 = vmatpush2.msra.mxu0 0.0
    %426 = vmatprep.subr.mxu0 0.0
    %427 = vmatpush2.msra.mxu0 0.0
    %428 = vmatprep.subr.mxu0 0.0
    %429 = vmatpush2.msra.mxu0 0.0
    %430 = vmatprep.subr.mxu0 0.0
    %431 = vmatpush2.msra.mxu0 0.0
    %432 = vmatprep.subr.mxu0 0.0
    %433 = vmatpush2.msra.mxu0 0.0
    %434 = vmatprep.subr.mxu0 0.0
    %435 = vmatpush2.msra.mxu0 0.0
    %436 = vmatprep.subr.mxu0 0.0
    %437 = vmatpush2.msra.mxu0 0.0
    %438 = vmatprep.subr.mxu0 0.0
    %439 = vmatpush2.msra.mxu0 0.0
    %440 = vmatprep.subr.mxu0 0.0
    %441 = vmatpush2.msra.mxu0 0.0
    %442 = vmatprep.subr.mxu0 0.0
    %443 = vmatpush2.msra.mxu0 0.0
    %444 = vmatprep.subr.mxu0 0.0
    %445 = vmatpush2.msra.mxu0 0.0
    %446 = vmatprep.subr.mxu0 0.0
    %447 = vmatpush2.msra.mxu0 0.0
    %448 = vmatprep.mubr.f32.mxu0 0.0
    %449 = vmatmul.mubr.f32.gmra.mxu0 %v360
    %v450 = vpop.f32.mrf.mxu0
    %v451 = vadd.f32 %v382, %v450
    %v452 = vpop.f32.mrf.mxu0
    %453 = vdwg.mxu0
    %v455 = vsel %vm72, %v75, 0
    %457 = vmatprep.subr.mxu0 0.0
    %458 = vmatpush1.msra.mxu0 0.0
    %459 = vmatprep.subr.mxu0 0.0
    %460 = vmatpush1.msra.mxu0 0.0
    %461 = vmatprep.subr.mxu0 0.0
    %462 = vmatpush1.msra.mxu0 0.0
    %463 = vmatprep.subr.mxu0 0.0
    %464 = vmatpush1.msra.mxu0 0.0
    %465 = vmatprep.subr.mxu0 0.0
    %466 = vmatpush1.msra.mxu0 0.0
    %467 = vmatprep.subr.mxu0 0.0
    %468 = vmatpush1.msra.mxu0 0.0
    %469 = vmatprep.subr.mxu0 0.0
    %470 = vmatpush1.msra.mxu0 0.0
    %471 = vmatprep.subr.mxu0 0.0
    %472 = vmatpush1.msra.mxu0 0.0
    %473 = vmatprep.subr.mxu0 0.0
    %474 = vmatpush1.msra.mxu0 0.0
    %475 = vmatprep.subr.mxu0 0.0
    %476 = vmatpush1.msra.mxu0 0.0
    %477 = vmatprep.subr.mxu0 0.0
    %478 = vmatpush1.msra.mxu0 0.0
    %479 = vmatprep.subr.mxu0 0.0
    %480 = vmatpush1.msra.mxu0 0.0
    %481 = vmatprep.subr.mxu0 0.0
    %482 = vmatpush1.msra.mxu0 0.0
    %483 = vmatprep.subr.mxu0 0.0
    %484 = vmatpush1.msra.mxu0 0.0
    %485 = vmatprep.subr.mxu0 0.0
    %486 = vmatpush1.msra.mxu0 0.0
    %487 = vmatprep.subr.mxu0 0.0
    %488 = vmatpush1.msra.mxu0 %v451
    %489 = vmatprep.subr.mxu0 0.0
    %490 = vmatpush2.msra.mxu0 0.0
    %491 = vmatprep.subr.mxu0 0.0
    %492 = vmatpush2.msra.mxu0 0.0
    %493 = vmatprep.subr.mxu0 0.0
    %494 = vmatpush2.msra.mxu0 0.0
    %495 = vmatprep.subr.mxu0 0.0
    %496 = vmatpush2.msra.mxu0 0.0
    %497 = vmatprep.subr.mxu0 0.0
    %498 = vmatpush2.msra.mxu0 0.0
    %499 = vmatprep.subr.mxu0 0.0
    %500 = vmatpush2.msra.mxu0 0.0
    %501 = vmatprep.subr.mxu0 0.0
    %502 = vmatpush2.msra.mxu0 0.0
    %503 = vmatprep.subr.mxu0 0.0
    %504 = vmatpush2.msra.mxu0 0.0
    %505 = vmatprep.subr.mxu0 0.0
    %506 = vmatpush2.msra.mxu0 0.0
    %507 = vmatprep.subr.mxu0 0.0
    %508 = vmatpush2.msra.mxu0 0.0
    %509 = vmatprep.subr.mxu0 0.0
    %510 = vmatpush2.msra.mxu0 0.0
    %511 = vmatprep.subr.mxu0 0.0
    %512 = vmatpush2.msra.mxu0 0.0
    %513 = vmatprep.subr.mxu0 0.0
    %514 = vmatpush2.msra.mxu0 0.0
    %515 = vmatprep.subr.mxu0 0.0
    %516 = vmatpush2.msra.mxu0 0.0
    %517 = vmatprep.subr.mxu0 0.0
    %518 = vmatpush2.msra.mxu0 0.0
    %519 = vmatprep.subr.mxu0 0.0
    %520 = vmatpush2.msra.mxu0 0.0
    %521 = vmatprep.mubr.f32.mxu0 0.0
    %522 = vmatmul.mubr.f32.gmra.mxu0 %v455
    %v523 = vpop.f32.mrf.mxu0
    %v524 = vadd.f32 0.0, %v523
    %v525 = vpop.f32.mrf.mxu0
    %526 = vdwg.mxu0
    %v527 = vadd.f32 %v262, %v524
    %528 = vmatprep.subr.mxu0 0.0
    %529 = vmatpush1.msra.mxu0 %v280
    %530 = vmatprep.subr.mxu0 0.0
    %531 = vmatpush1.msra.mxu0 %v279
    %532 = vmatprep.subr.mxu0 0.0
    %533 = vmatpush1.msra.mxu0 %v278
    %534 = vmatprep.subr.mxu0 0.0
    %535 = vmatpush1.msra.mxu0 %v277
    %536 = vmatprep.subr.mxu0 0.0
    %537 = vmatpush1.msra.mxu0 %v276
    %538 = vmatprep.subr.mxu0 0.0
    %539 = vmatpush1.msra.mxu0 %v275
    %540 = vmatprep.subr.mxu0 0.0
    %541 = vmatpush1.msra.mxu0 %v274
    %542 = vmatprep.subr.mxu0 0.0
    %543 = vmatpush1.msra.mxu0 %v273
    %544 = vmatprep.subr.mxu0 0.0
    %545 = vmatpush1.msra.mxu0 %v272
    %546 = vmatprep.subr.mxu0 0.0
    %547 = vmatpush1.msra.mxu0 %v271
    %548 = vmatprep.subr.mxu0 0.0
    %549 = vmatpush1.msra.mxu0 %v270
    %550 = vmatprep.subr.mxu0 0.0
    %551 = vmatpush1.msra.mxu0 %v269
    %552 = vmatprep.subr.mxu0 0.0
    %553 = vmatpush1.msra.mxu0 %v268
    %554 = vmatprep.subr.mxu0 0.0
    %555 = vmatpush1.msra.mxu0 %v267
    %556 = vmatprep.subr.mxu0 0.0
    %557 = vmatpush1.msra.mxu0 %v266
    %558 = vmatprep.subr.mxu0 0.0
    %559 = vmatpush1.msra.mxu0 %v265
    %560 = vmatprep.subr.mxu0 0.0
    %561 = vmatpush2.msra.mxu0 0.0
    %562 = vmatprep.subr.mxu0 0.0
    %563 = vmatpush2.msra.mxu0 0.0
    %564 = vmatprep.subr.mxu0 0.0
    %565 = vmatpush2.msra.mxu0 0.0
    %566 = vmatprep.subr.mxu0 0.0
    %567 = vmatpush2.msra.mxu0 0.0
    %568 = vmatprep.subr.mxu0 0.0
    %569 = vmatpush2.msra.mxu0 0.0
    %570 = vmatprep.subr.mxu0 0.0
    %571 = vmatpush2.msra.mxu0 0.0
    %572 = vmatprep.subr.mxu0 0.0
    %573 = vmatpush2.msra.mxu0 0.0
    %574 = vmatprep.subr.mxu0 0.0
    %575 = vmatpush2.msra.mxu0 0.0
    %576 = vmatprep.subr.mxu0 0.0
    %577 = vmatpush2.msra.mxu0 0.0
    %578 = vmatprep.subr.mxu0 0.0
    %579 = vmatpush2.msra.mxu0 0.0
    %580 = vmatprep.subr.mxu0 0.0
    %581 = vmatpush2.msra.mxu0 0.0
    %582 = vmatprep.subr.mxu0 0.0
    %583 = vmatpush2.msra.mxu0 0.0
    %584 = vmatprep.subr.mxu0 0.0
    %585 = vmatpush2.msra.mxu0 0.0
    %586 = vmatprep.subr.mxu0 0.0
    %587 = vmatpush2.msra.mxu0 0.0
    %588 = vmatprep.subr.mxu0 0.0
    %589 = vmatpush2.msra.mxu0 0.0
    %590 = vmatprep.subr.mxu0 0.0
    %591 = vmatpush2.msra.mxu0 0.0
    %592 = vmatprep.mubr.f32.mxu0 0.0
    %593 = vmatmul.mubr.f32.gmra.mxu0 %v527
    %v594 = vpop.f32.mrf.mxu0
    %v595 = vadd.f32 %v286, %v594
    %v596 = vpop.f32.mrf.mxu0
    %597 = vdwg.mxu0
    %vm598 = vcmp.gt.f32.partialorder %v595, 0.0
    %v599 = vmul.f32 %v595, 0.01
    %v600 = vsel %vm598, %v595, %v599
    %601 = vmatprep.subr.mxu0 0.0
    %602 = vmatpush1.msra.mxu0 %v376
    %603 = vmatprep.subr.mxu0 0.0
    %604 = vmatpush1.msra.mxu0 %v375
    %605 = vmatprep.subr.mxu0 0.0
    %606 = vmatpush1.msra.mxu0 %v374
    %607 = vmatprep.subr.mxu0 0.0
    %608 = vmatpush1.msra.mxu0 %v373
    %609 = vmatprep.subr.mxu0 0.0
    %610 = vmatpush1.msra.mxu0 %v372
    %611 = vmatprep.subr.mxu0 0.0
    %612 = vmatpush1.msra.mxu0 %v371
    %613 = vmatprep.subr.mxu0 0.0
    %614 = vmatpush1.msra.mxu0 %v370
    %615 = vmatprep.subr.mxu0 0.0
    %616 = vmatpush1.msra.mxu0 %v369
    %617 = vmatprep.subr.mxu0 0.0
    %618 = vmatpush1.msra.mxu0 %v368
    %619 = vmatprep.subr.mxu0 0.0
    %620 = vmatpush1.msra.mxu0 %v367
    %621 = vmatprep.subr.mxu0 0.0
    %622 = vmatpush1.msra.mxu0 %v366
    %623 = vmatprep.subr.mxu0 0.0
    %624 = vmatpush1.msra.mxu0 %v365
    %625 = vmatprep.subr.mxu0 0.0
    %626 = vmatpush1.msra.mxu0 %v364
    %627 = vmatprep.subr.mxu0 0.0
    %628 = vmatpush1.msra.mxu0 %v363
    %629 = vmatprep.subr.mxu0 0.0
    %630 = vmatpush1.msra.mxu0 %v362
    %631 = vmatprep.subr.mxu0 0.0
    %632 = vmatpush1.msra.mxu0 %v361
    %633 = vmatprep.subr.mxu0 0.0
    %634 = vmatpush2.msra.mxu0 0.0
    %635 = vmatprep.subr.mxu0 0.0
    %636 = vmatpush2.msra.mxu0 0.0
    %637 = vmatprep.subr.mxu0 0.0
    %638 = vmatpush2.msra.mxu0 0.0
    %639 = vmatprep.subr.mxu0 0.0
    %640 = vmatpush2.msra.mxu0 0.0
    %641 = vmatprep.subr.mxu0 0.0
    %642 = vmatpush2.msra.mxu0 0.0
    %643 = vmatprep.subr.mxu0 0.0
    %644 = vmatpush2.msra.mxu0 0.0
    %645 = vmatprep.subr.mxu0 0.0
    %646 = vmatpush2.msra.mxu0 0.0
    %647 = vmatprep.subr.mxu0 0.0
    %648 = vmatpush2.msra.mxu0 0.0
    %649 = vmatprep.subr.mxu0 0.0
    %650 = vmatpush2.msra.mxu0 0.0
    %651 = vmatprep.subr.mxu0 0.0
    %652 = vmatpush2.msra.mxu0 0.0
    %653 = vmatprep.subr.mxu0 0.0
    %654 = vmatpush2.msra.mxu0 0.0
    %655 = vmatprep.subr.mxu0 0.0
    %656 = vmatpush2.msra.mxu0 0.0
    %657 = vmatprep.subr.mxu0 0.0
    %658 = vmatpush2.msra.mxu0 0.0
    %659 = vmatprep.subr.mxu0 0.0
    %660 = vmatpush2.msra.mxu0 0.0
    %661 = vmatprep.subr.mxu0 0.0
    %662 = vmatpush2.msra.mxu0 0.0
    %663 = vmatprep.subr.mxu0 0.0
    %664 = vmatpush2.msra.mxu0 0.0
    %665 = vmatprep.mubr.f32.mxu0 0.0
    %666 = vmatmul.mubr.f32.gmra.mxu0 %v600
    %v667 = vpop.f32.mrf.mxu0
    %v668 = vadd.f32 %v382, %v667
    %v669 = vpop.f32.mrf.mxu0
    %670 = vdwg.mxu0
    %671 = vmatprep.subr.mxu0 0.0
    %672 = vmatpush1.msra.mxu0 0.0
    %673 = vmatprep.subr.mxu0 0.0
    %674 = vmatpush1.msra.mxu0 0.0
    %675 = vmatprep.subr.mxu0 0.0
    %676 = vmatpush1.msra.mxu0 0.0
    %677 = vmatprep.subr.mxu0 0.0
    %678 = vmatpush1.msra.mxu0 0.0
    %679 = vmatprep.subr.mxu0 0.0
    %680 = vmatpush1.msra.mxu0 0.0
    %681 = vmatprep.subr.mxu0 0.0
    %682 = vmatpush1.msra.mxu0 0.0
    %683 = vmatprep.subr.mxu0 0.0
    %684 = vmatpush1.msra.mxu0 0.0
    %685 = vmatprep.subr.mxu0 0.0
    %686 = vmatpush1.msra.mxu0 0.0
    %687 = vmatprep.subr.mxu0 0.0
    %688 = vmatpush1.msra.mxu0 0.0
    %689 = vmatprep.subr.mxu0 0.0
    %690 = vmatpush1.msra.mxu0 0.0
    %691 = vmatprep.subr.mxu0 0.0
    %692 = vmatpush1.msra.mxu0 0.0
    %693 = vmatprep.subr.mxu0 0.0
    %694 = vmatpush1.msra.mxu0 0.0
    %695 = vmatprep.subr.mxu0 0.0
    %696 = vmatpush1.msra.mxu0 0.0
    %697 = vmatprep.subr.mxu0 0.0
    %698 = vmatpush1.msra.mxu0 0.0
    %699 = vmatprep.subr.mxu0 0.0
    %700 = vmatpush1.msra.mxu0 0.0
    %701 = vmatprep.subr.mxu0 0.0
    %702 = vmatpush1.msra.mxu0 %v668
    %703 = vmatprep.subr.mxu0 0.0
    %704 = vmatpush2.msra.mxu0 0.0
    %705 = vmatprep.subr.mxu0 0.0
    %706 = vmatpush2.msra.mxu0 0.0
    %707 = vmatprep.subr.mxu0 0.0
    %708 = vmatpush2.msra.mxu0 0.0
    %709 = vmatprep.subr.mxu0 0.0
    %710 = vmatpush2.msra.mxu0 0.0
    %711 = vmatprep.subr.mxu0 0.0
    %712 = vmatpush2.msra.mxu0 0.0
    %713 = vmatprep.subr.mxu0 0.0
    %714 = vmatpush2.msra.mxu0 0.0
    %715 = vmatprep.subr.mxu0 0.0
    %716 = vmatpush2.msra.mxu0 0.0
    %717 = vmatprep.subr.mxu0 0.0
    %718 = vmatpush2.msra.mxu0 0.0
    %719 = vmatprep.subr.mxu0 0.0
    %720 = vmatpush2.msra.mxu0 0.0
    %721 = vmatprep.subr.mxu0 0.0
    %722 = vmatpush2.msra.mxu0 0.0
    %723 = vmatprep.subr.mxu0 0.0
    %724 = vmatpush2.msra.mxu0 0.0
    %725 = vmatprep.subr.mxu0 0.0
    %726 = vmatpush2.msra.mxu0 0.0
    %727 = vmatprep.subr.mxu0 0.0
    %728 = vmatpush2.msra.mxu0 0.0
    %729 = vmatprep.subr.mxu0 0.0
    %730 = vmatpush2.msra.mxu0 0.0
    %731 = vmatprep.subr.mxu0 0.0
    %732 = vmatpush2.msra.mxu0 0.0
    %733 = vmatprep.subr.mxu0 0.0
    %734 = vmatpush2.msra.mxu0 0.0
    %735 = vmatprep.mubr.f32.mxu0 0.0
    %736 = vmatmul.mubr.f32.gmra.mxu0 %v455
    %v737 = vpop.f32.mrf.mxu0
    %v738 = vadd.f32 0.0, %v737
    %v739 = vpop.f32.mrf.mxu0
    %740 = vdwg.mxu0
    %v741 = vadd.f32 %v527, %v738
    %v742 = vld [vmem:[#allocation7 + $0x20] sm:$0xff]
    %v743 = vld [vmem:[#allocation7 + $0x78] sm:$0xff]
    %v744 = vld [vmem:[#allocation7 + $0xd0] sm:$0xff]
    %v745 = vld [vmem:[#allocation7 + $0x128] sm:$0xff]
    %v746 = vld [vmem:[#allocation7 + $0x180] sm:$0xff]
    %v747 = vld [vmem:[#allocation7 + $0x1d8] sm:$0xff]
    %v748 = vld [vmem:[#allocation7 + $0x230] sm:$0xff]
    %v749 = vld [vmem:[#allocation7 + $0x288] sm:$0xff]
    %v750 = vld [vmem:[#allocation7 + $0x2e0] sm:$0xff]
    %v751 = vld [vmem:[#allocation7 + $0x338] sm:$0xff]
    %v752 = vld [vmem:[#allocation7 + $0x390] sm:$0xff]
    %v753 = vld [vmem:[#allocation7 + $0x3e8] sm:$0xff]
    %v754 = vld [vmem:[#allocation7 + $0x440] sm:$0xff]
    %v755 = vld [vmem:[#allocation7 + $0x498] sm:$0xff]
    %v756 = vld [vmem:[#allocation7 + $0x4f0] sm:$0xff]
    %v757 = vld [vmem:[#allocation7 + $0x548] sm:$0xff]
    %v758 = vld [vmem:[#allocation8 + $0x4] sm:$0x1]
    %v760 = vlaneseq
    %v761 = vshrl.u32 %v760, 7
    %v762 = vsub.s32 0, %v761
    %v763 = vrot.slane %v758, %v762
    %765 = vmatprep.subr.mxu0 0.0
    %766 = vmatpush1.msra.mxu0 %v757
    %767 = vmatprep.subr.mxu0 0.0
    %768 = vmatpush1.msra.mxu0 %v756
    %769 = vmatprep.subr.mxu0 0.0
    %770 = vmatpush1.msra.mxu0 %v755
    %771 = vmatprep.subr.mxu0 0.0
    %772 = vmatpush1.msra.mxu0 %v754
    %773 = vmatprep.subr.mxu0 0.0
    %774 = vmatpush1.msra.mxu0 %v753
    %775 = vmatprep.subr.mxu0 0.0
    %776 = vmatpush1.msra.mxu0 %v752
    %777 = vmatprep.subr.mxu0 0.0
    %778 = vmatpush1.msra.mxu0 %v751
    %779 = vmatprep.subr.mxu0 0.0
    %780 = vmatpush1.msra.mxu0 %v750
    %781 = vmatprep.subr.mxu0 0.0
    %782 = vmatpush1.msra.mxu0 %v749
    %783 = vmatprep.subr.mxu0 0.0
    %784 = vmatpush1.msra.mxu0 %v748
    %785 = vmatprep.subr.mxu0 0.0
    %786 = vmatpush1.msra.mxu0 %v747
    %787 = vmatprep.subr.mxu0 0.0
    %788 = vmatpush1.msra.mxu0 %v746
    %789 = vmatprep.subr.mxu0 0.0
    %790 = vmatpush1.msra.mxu0 %v745
    %791 = vmatprep.subr.mxu0 0.0
    %792 = vmatpush1.msra.mxu0 %v744
    %793 = vmatprep.subr.mxu0 0.0
    %794 = vmatpush1.msra.mxu0 %v743
    %795 = vmatprep.subr.mxu0 0.0
    %796 = vmatpush1.msra.mxu0 %v742
    %797 = vmatprep.subr.mxu0 0.0
    %798 = vmatpush2.msra.mxu0 0.0
    %799 = vmatprep.subr.mxu0 0.0
    %800 = vmatpush2.msra.mxu0 0.0
    %801 = vmatprep.subr.mxu0 0.0
    %802 = vmatpush2.msra.mxu0 0.0
    %803 = vmatprep.subr.mxu0 0.0
    %804 = vmatpush2.msra.mxu0 0.0
    %805 = vmatprep.subr.mxu0 0.0
    %806 = vmatpush2.msra.mxu0 0.0
    %807 = vmatprep.subr.mxu0 0.0
    %808 = vmatpush2.msra.mxu0 0.0
    %809 = vmatprep.subr.mxu0 0.0
    %810 = vmatpush2.msra.mxu0 0.0
    %811 = vmatprep.subr.mxu0 0.0
    %812 = vmatpush2.msra.mxu0 0.0
    %813 = vmatprep.subr.mxu0 0.0
    %814 = vmatpush2.msra.mxu0 0.0
    %815 = vmatprep.subr.mxu0 0.0
    %816 = vmatpush2.msra.mxu0 0.0
    %817 = vmatprep.subr.mxu0 0.0
    %818 = vmatpush2.msra.mxu0 0.0
    %819 = vmatprep.subr.mxu0 0.0
    %820 = vmatpush2.msra.mxu0 0.0
    %821 = vmatprep.subr.mxu0 0.0
    %822 = vmatpush2.msra.mxu0 0.0
    %823 = vmatprep.subr.mxu0 0.0
    %824 = vmatpush2.msra.mxu0 0.0
    %825 = vmatprep.subr.mxu0 0.0
    %826 = vmatpush2.msra.mxu0 0.0
    %827 = vmatprep.subr.mxu0 0.0
    %828 = vmatpush2.msra.mxu0 0.0
    %829 = vmatprep.mubr.f32.mxu0 0.0
    %830 = vmatmul.mubr.f32.gmra.mxu0 %v741
    %v831 = vpop.f32.mrf.mxu0
    %v832 = vadd.f32 %v763, %v831
    %v833 = vpop.f32.mrf.mxu0
    %834 = vdwg.mxu0
    %vm835 = vcmp.gt.f32.partialorder %v832, 0.0
    %v836 = vmul.f32 %v832, 0.01
    %v837 = vsel %vm835, %v832, %v836
    %v838 = vld [vmem:[#allocation7 + $0x28] sm:$0xff]
    %v839 = vld [vmem:[#allocation7 + $0x80] sm:$0xff]
    %v840 = vld [vmem:[#allocation7 + $0xd8] sm:$0xff]
    %v841 = vld [vmem:[#allocation7 + $0x130] sm:$0xff]
    %v842 = vld [vmem:[#allocation7 + $0x188] sm:$0xff]
    %v843 = vld [vmem:[#allocation7 + $0x1e0] sm:$0xff]
    %v844 = vld [vmem:[#allocation7 + $0x238] sm:$0xff]
    %v845 = vld [vmem:[#allocation7 + $0x290] sm:$0xff]
    %v846 = vld [vmem:[#allocation7 + $0x2e8] sm:$0xff]
    %v847 = vld [vmem:[#allocation7 + $0x340] sm:$0xff]
    %v848 = vld [vmem:[#allocation7 + $0x398] sm:$0xff]
    %v849 = vld [vmem:[#allocation7 + $0x3f0] sm:$0xff]
    %v850 = vld [vmem:[#allocation7 + $0x448] sm:$0xff]
    %v851 = vld [vmem:[#allocation7 + $0x4a0] sm:$0xff]
    %v852 = vld [vmem:[#allocation7 + $0x4f8] sm:$0xff]
    %v853 = vld [vmem:[#allocation7 + $0x550] sm:$0xff]
    %v854 = vld [vmem:[#allocation8 + $0x5] sm:$0x1]
    %v856 = vlaneseq
    %v857 = vshrl.u32 %v856, 7
    %v858 = vsub.s32 0, %v857
    %v859 = vrot.slane %v854, %v858
    %861 = vmatprep.subr.mxu0 0.0
    %862 = vmatpush1.msra.mxu0 %v853
    %863 = vmatprep.subr.mxu0 0.0
    %864 = vmatpush1.msra.mxu0 %v852
    %865 = vmatprep.subr.mxu0 0.0
    %866 = vmatpush1.msra.mxu0 %v851
    %867 = vmatprep.subr.mxu0 0.0
    %868 = vmatpush1.msra.mxu0 %v850
    %869 = vmatprep.subr.mxu0 0.0
    %870 = vmatpush1.msra.mxu0 %v849
    %871 = vmatprep.subr.mxu0 0.0
    %872 = vmatpush1.msra.mxu0 %v848
    %873 = vmatprep.subr.mxu0 0.0
    %874 = vmatpush1.msra.mxu0 %v847
    %875 = vmatprep.subr.mxu0 0.0
    %876 = vmatpush1.msra.mxu0 %v846
    %877 = vmatprep.subr.mxu0 0.0
    %878 = vmatpush1.msra.mxu0 %v845
    %879 = vmatprep.subr.mxu0 0.0
    %880 = vmatpush1.msra.mxu0 %v844
    %881 = vmatprep.subr.mxu0 0.0
    %882 = vmatpush1.msra.mxu0 %v843
    %883 = vmatprep.subr.mxu0 0.0
    %884 = vmatpush1.msra.mxu0 %v842
    %885 = vmatprep.subr.mxu0 0.0
    %886 = vmatpush1.msra.mxu0 %v841
    %887 = vmatprep.subr.mxu0 0.0
    %888 = vmatpush1.msra.mxu0 %v840
    %889 = vmatprep.subr.mxu0 0.0
    %890 = vmatpush1.msra.mxu0 %v839
    %891 = vmatprep.subr.mxu0 0.0
    %892 = vmatpush1.msra.mxu0 %v838
    %893 = vmatprep.subr.mxu0 0.0
    %894 = vmatpush2.msra.mxu0 0.0
    %895 = vmatprep.subr.mxu0 0.0
    %896 = vmatpush2.msra.mxu0 0.0
    %897 = vmatprep.subr.mxu0 0.0
    %898 = vmatpush2.msra.mxu0 0.0
    %899 = vmatprep.subr.mxu0 0.0
    %900 = vmatpush2.msra.mxu0 0.0
    %901 = vmatprep.subr.mxu0 0.0
    %902 = vmatpush2.msra.mxu0 0.0
    %903 = vmatprep.subr.mxu0 0.0
    %904 = vmatpush2.msra.mxu0 0.0
    %905 = vmatprep.subr.mxu0 0.0
    %906 = vmatpush2.msra.mxu0 0.0
    %907 = vmatprep.subr.mxu0 0.0
    %908 = vmatpush2.msra.mxu0 0.0
    %909 = vmatprep.subr.mxu0 0.0
    %910 = vmatpush2.msra.mxu0 0.0
    %911 = vmatprep.subr.mxu0 0.0
    %912 = vmatpush2.msra.mxu0 0.0
    %913 = vmatprep.subr.mxu0 0.0
    %914 = vmatpush2.msra.mxu0 0.0
    %915 = vmatprep.subr.mxu0 0.0
    %916 = vmatpush2.msra.mxu0 0.0
    %917 = vmatprep.subr.mxu0 0.0
    %918 = vmatpush2.msra.mxu0 0.0
    %919 = vmatprep.subr.mxu0 0.0
    %920 = vmatpush2.msra.mxu0 0.0
    %921 = vmatprep.subr.mxu0 0.0
    %922 = vmatpush2.msra.mxu0 0.0
    %923 = vmatprep.subr.mxu0 0.0
    %924 = vmatpush2.msra.mxu0 0.0
    %925 = vmatprep.mubr.f32.mxu0 0.0
    %926 = vmatmul.mubr.f32.gmra.mxu0 %v837
    %v927 = vpop.f32.mrf.mxu0
    %v928 = vadd.f32 %v859, %v927
    %v929 = vpop.f32.mrf.mxu0
    %930 = vdwg.mxu0
    %v931 = vld [vmem:[#allocation7 + $0x30] sm:$0xff]
    %v932 = vld [vmem:[#allocation7 + $0x88] sm:$0xff]
    %v933 = vld [vmem:[#allocation7 + $0xe0] sm:$0xff]
    %v934 = vld [vmem:[#allocation7 + $0x138] sm:$0xff]
    %v935 = vld [vmem:[#allocation7 + $0x190] sm:$0xff]
    %v936 = vld [vmem:[#allocation7 + $0x1e8] sm:$0xff]
    %v937 = vld [vmem:[#allocation7 + $0x240] sm:$0xff]
    %v938 = vld [vmem:[#allocation7 + $0x298] sm:$0xff]
    %v939 = vld [vmem:[#allocation7 + $0x2f0] sm:$0xff]
    %v940 = vld [vmem:[#allocation7 + $0x348] sm:$0xff]
    %v941 = vld [vmem:[#allocation7 + $0x3a0] sm:$0xff]
    %v942 = vld [vmem:[#allocation7 + $0x3f8] sm:$0xff]
    %v943 = vld [vmem:[#allocation7 + $0x450] sm:$0xff]
    %v944 = vld [vmem:[#allocation7 + $0x4a8] sm:$0xff]
    %v945 = vld [vmem:[#allocation7 + $0x500] sm:$0xff]
    %v946 = vld [vmem:[#allocation7 + $0x558] sm:$0xff]
    %v947 = vld [vmem:[#allocation8 + $0x6] sm:$0x1]
    %v949 = vlaneseq
    %v950 = vshrl.u32 %v949, 7
    %v951 = vsub.s32 0, %v950
    %v952 = vrot.slane %v947, %v951
    %954 = vmatprep.subr.mxu0 0.0
    %955 = vmatpush1.msra.mxu0 %v946
    %956 = vmatprep.subr.mxu0 0.0
    %957 = vmatpush1.msra.mxu0 %v945
    %958 = vmatprep.subr.mxu0 0.0
    %959 = vmatpush1.msra.mxu0 %v944
    %960 = vmatprep.subr.mxu0 0.0
    %961 = vmatpush1.msra.mxu0 %v943
    %962 = vmatprep.subr.mxu0 0.0
    %963 = vmatpush1.msra.mxu0 %v942
    %964 = vmatprep.subr.mxu0 0.0
    %965 = vmatpush1.msra.mxu0 %v941
    %966 = vmatprep.subr.mxu0 0.0
    %967 = vmatpush1.msra.mxu0 %v940
    %968 = vmatprep.subr.mxu0 0.0
    %969 = vmatpush1.msra.mxu0 %v939
    %970 = vmatprep.subr.mxu0 0.0
    %971 = vmatpush1.msra.mxu0 %v938
    %972 = vmatprep.subr.mxu0 0.0
    %973 = vmatpush1.msra.mxu0 %v937
    %974 = vmatprep.subr.mxu0 0.0
    %975 = vmatpush1.msra.mxu0 %v936
    %976 = vmatprep.subr.mxu0 0.0
    %977 = vmatpush1.msra.mxu0 %v935
    %978 = vmatprep.subr.mxu0 0.0
    %979 = vmatpush1.msra.mxu0 %v934
    %980 = vmatprep.subr.mxu0 0.0
    %981 = vmatpush1.msra.mxu0 %v933
    %982 = vmatprep.subr.mxu0 0.0
    %983 = vmatpush1.msra.mxu0 %v932
    %984 = vmatprep.subr.mxu0 0.0
    %985 = vmatpush1.msra.mxu0 %v931
    %986 = vmatprep.subr.mxu0 0.0
    %987 = vmatpush2.msra.mxu0 0.0
    %988 = vmatprep.subr.mxu0 0.0
    %989 = vmatpush2.msra.mxu0 0.0
    %990 = vmatprep.subr.mxu0 0.0
    %991 = vmatpush2.msra.mxu0 0.0
    %992 = vmatprep.subr.mxu0 0.0
    %993 = vmatpush2.msra.mxu0 0.0
    %994 = vmatprep.subr.mxu0 0.0
    %995 = vmatpush2.msra.mxu0 0.0
    %996 = vmatprep.subr.mxu0 0.0
    %997 = vmatpush2.msra.mxu0 0.0
    %998 = vmatprep.subr.mxu0 0.0
    %999 = vmatpush2.msra.mxu0 0.0
    %1000 = vmatprep.subr.mxu0 0.0
    %1001 = vmatpush2.msra.mxu0 0.0
    %1002 = vmatprep.subr.mxu0 0.0
    %1003 = vmatpush2.msra.mxu0 0.0
    %1004 = vmatprep.subr.mxu0 0.0
    %1005 = vmatpush2.msra.mxu0 0.0
    %1006 = vmatprep.subr.mxu0 0.0
    %1007 = vmatpush2.msra.mxu0 0.0
    %1008 = vmatprep.subr.mxu0 0.0
    %1009 = vmatpush2.msra.mxu0 0.0
    %1010 = vmatprep.subr.mxu0 0.0
    %1011 = vmatpush2.msra.mxu0 0.0
    %1012 = vmatprep.subr.mxu0 0.0
    %1013 = vmatpush2.msra.mxu0 0.0
    %1014 = vmatprep.subr.mxu0 0.0
    %1015 = vmatpush2.msra.mxu0 0.0
    %1016 = vmatprep.subr.mxu0 0.0
    %1017 = vmatpush2.msra.mxu0 0.0
    %1018 = vmatprep.mubr.f32.mxu0 0.0
    %1019 = vmatmul.mubr.f32.gmra.mxu0 %v928
    %v1020 = vpop.f32.mrf.mxu0
    %v1021 = vadd.f32 %v952, %v1020
    %v1022 = vpop.f32.mrf.mxu0
    %1023 = vdwg.mxu0
    %vm1024 = vcmp.gt.f32.partialorder %v1021, 0.0
    %v1025 = vmul.f32 %v1021, 0.01
    %v1026 = vsel %vm1024, %v1021, %v1025
    %v1027 = vld [vmem:[#allocation7 + $0x38] sm:$0xff]
    %v1028 = vld [vmem:[#allocation7 + $0x90] sm:$0xff]
    %v1029 = vld [vmem:[#allocation7 + $0xe8] sm:$0xff]
    %v1030 = vld [vmem:[#allocation7 + $0x140] sm:$0xff]
    %v1031 = vld [vmem:[#allocation7 + $0x198] sm:$0xff]
    %v1032 = vld [vmem:[#allocation7 + $0x1f0] sm:$0xff]
    %v1033 = vld [vmem:[#allocation7 + $0x248] sm:$0xff]
    %v1034 = vld [vmem:[#allocation7 + $0x2a0] sm:$0xff]
    %v1035 = vld [vmem:[#allocation7 + $0x2f8] sm:$0xff]
    %v1036 = vld [vmem:[#allocation7 + $0x350] sm:$0xff]
    %v1037 = vld [vmem:[#allocation7 + $0x3a8] sm:$0xff]
    %v1038 = vld [vmem:[#allocation7 + $0x400] sm:$0xff]
    %v1039 = vld [vmem:[#allocation7 + $0x458] sm:$0xff]
    %v1040 = vld [vmem:[#allocation7 + $0x4b0] sm:$0xff]
    %v1041 = vld [vmem:[#allocation7 + $0x508] sm:$0xff]
    %v1042 = vld [vmem:[#allocation7 + $0x560] sm:$0xff]
    %v1043 = vld [vmem:[#allocation8 + $0x7] sm:$0x1]
    %v1045 = vlaneseq
    %v1046 = vshrl.u32 %v1045, 7
    %v1047 = vsub.s32 0, %v1046
    %v1048 = vrot.slane %v1043, %v1047
    %1050 = vmatprep.subr.mxu0 0.0
    %1051 = vmatpush1.msra.mxu0 %v1042
    %1052 = vmatprep.subr.mxu0 0.0
    %1053 = vmatpush1.msra.mxu0 %v1041
    %1054 = vmatprep.subr.mxu0 0.0
    %1055 = vmatpush1.msra.mxu0 %v1040
    %1056 = vmatprep.subr.mxu0 0.0
    %1057 = vmatpush1.msra.mxu0 %v1039
    %1058 = vmatprep.subr.mxu0 0.0
    %1059 = vmatpush1.msra.mxu0 %v1038
    %1060 = vmatprep.subr.mxu0 0.0
    %1061 = vmatpush1.msra.mxu0 %v1037
    %1062 = vmatprep.subr.mxu0 0.0
    %1063 = vmatpush1.msra.mxu0 %v1036
    %1064 = vmatprep.subr.mxu0 0.0
    %1065 = vmatpush1.msra.mxu0 %v1035
    %1066 = vmatprep.subr.mxu0 0.0
    %1067 = vmatpush1.msra.mxu0 %v1034
    %1068 = vmatprep.subr.mxu0 0.0
    %1069 = vmatpush1.msra.mxu0 %v1033
    %1070 = vmatprep.subr.mxu0 0.0
    %1071 = vmatpush1.msra.mxu0 %v1032
    %1072 = vmatprep.subr.mxu0 0.0
    %1073 = vmatpush1.msra.mxu0 %v1031
    %1074 = vmatprep.subr.mxu0 0.0
    %1075 = vmatpush1.msra.mxu0 %v1030
    %1076 = vmatprep.subr.mxu0 0.0
    %1077 = vmatpush1.msra.mxu0 %v1029
    %1078 = vmatprep.subr.mxu0 0.0
    %1079 = vmatpush1.msra.mxu0 %v1028
    %1080 = vmatprep.subr.mxu0 0.0
    %1081 = vmatpush1.msra.mxu0 %v1027
    %1082 = vmatprep.subr.mxu0 0.0
    %1083 = vmatpush2.msra.mxu0 0.0
    %1084 = vmatprep.subr.mxu0 0.0
    %1085 = vmatpush2.msra.mxu0 0.0
    %1086 = vmatprep.subr.mxu0 0.0
    %1087 = vmatpush2.msra.mxu0 0.0
    %1088 = vmatprep.subr.mxu0 0.0
    %1089 = vmatpush2.msra.mxu0 0.0
    %1090 = vmatprep.subr.mxu0 0.0
    %1091 = vmatpush2.msra.mxu0 0.0
    %1092 = vmatprep.subr.mxu0 0.0
    %1093 = vmatpush2.msra.mxu0 0.0
    %1094 = vmatprep.subr.mxu0 0.0
    %1095 = vmatpush2.msra.mxu0 0.0
    %1096 = vmatprep.subr.mxu0 0.0
    %1097 = vmatpush2.msra.mxu0 0.0
    %1098 = vmatprep.subr.mxu0 0.0
    %1099 = vmatpush2.msra.mxu0 0.0
    %1100 = vmatprep.subr.mxu0 0.0
    %1101 = vmatpush2.msra.mxu0 0.0
    %1102 = vmatprep.subr.mxu0 0.0
    %1103 = vmatpush2.msra.mxu0 0.0
    %1104 = vmatprep.subr.mxu0 0.0
    %1105 = vmatpush2.msra.mxu0 0.0
    %1106 = vmatprep.subr.mxu0 0.0
    %1107 = vmatpush2.msra.mxu0 0.0
    %1108 = vmatprep.subr.mxu0 0.0
    %1109 = vmatpush2.msra.mxu0 0.0
    %1110 = vmatprep.subr.mxu0 0.0
    %1111 = vmatpush2.msra.mxu0 0.0
    %1112 = vmatprep.subr.mxu0 0.0
    %1113 = vmatpush2.msra.mxu0 0.0
    %1114 = vmatprep.mubr.f32.mxu0 0.0
    %1115 = vmatmul.mubr.f32.gmra.mxu0 %v1026
    %v1116 = vpop.f32.mrf.mxu0
    %v1117 = vadd.f32 %v1048, %v1116
    %v1118 = vpop.f32.mrf.mxu0
    %1119 = vdwg.mxu0
    %vm1120 = vcmp.gt.f32.partialorder %v1117, 0.0
    %v1121 = vmul.f32 %v1117, 0.01
    %v1122 = vsel %vm1120, %v1117, %v1121
    %v1123 = vld [vmem:[#allocation7 + $0x40] sm:$0xff]
    %v1124 = vld [vmem:[#allocation7 + $0x98] sm:$0xff]
    %v1125 = vld [vmem:[#allocation7 + $0xf0] sm:$0xff]
    %v1126 = vld [vmem:[#allocation7 + $0x148] sm:$0xff]
    %v1127 = vld [vmem:[#allocation7 + $0x1a0] sm:$0xff]
    %v1128 = vld [vmem:[#allocation7 + $0x1f8] sm:$0xff]
    %v1129 = vld [vmem:[#allocation7 + $0x250] sm:$0xff]
    %v1130 = vld [vmem:[#allocation7 + $0x2a8] sm:$0xff]
    %v1131 = vld [vmem:[#allocation7 + $0x300] sm:$0xff]
    %v1132 = vld [vmem:[#allocation7 + $0x358] sm:$0xff]
    %v1133 = vld [vmem:[#allocation7 + $0x3b0] sm:$0xff]
    %v1134 = vld [vmem:[#allocation7 + $0x408] sm:$0xff]
    %v1135 = vld [vmem:[#allocation7 + $0x460] sm:$0xff]
    %v1136 = vld [vmem:[#allocation7 + $0x4b8] sm:$0xff]
    %v1137 = vld [vmem:[#allocation7 + $0x510] sm:$0xff]
    %v1138 = vld [vmem:[#allocation7 + $0x568] sm:$0xff]
    %v1139 = vld [vmem:[#allocation8 + $0x8] sm:$0x1]
    %v1141 = vlaneseq
    %v1142 = vshrl.u32 %v1141, 7
    %v1143 = vsub.s32 0, %v1142
    %v1144 = vrot.slane %v1139, %v1143
    %1146 = vmatprep.subr.mxu0 0.0
    %1147 = vmatpush1.msra.mxu0 %v1138
    %1148 = vmatprep.subr.mxu0 0.0
    %1149 = vmatpush1.msra.mxu0 %v1137
    %1150 = vmatprep.subr.mxu0 0.0
    %1151 = vmatpush1.msra.mxu0 %v1136
    %1152 = vmatprep.subr.mxu0 0.0
    %1153 = vmatpush1.msra.mxu0 %v1135
    %1154 = vmatprep.subr.mxu0 0.0
    %1155 = vmatpush1.msra.mxu0 %v1134
    %1156 = vmatprep.subr.mxu0 0.0
    %1157 = vmatpush1.msra.mxu0 %v1133
    %1158 = vmatprep.subr.mxu0 0.0
    %1159 = vmatpush1.msra.mxu0 %v1132
    %1160 = vmatprep.subr.mxu0 0.0
    %1161 = vmatpush1.msra.mxu0 %v1131
    %1162 = vmatprep.subr.mxu0 0.0
    %1163 = vmatpush1.msra.mxu0 %v1130
    %1164 = vmatprep.subr.mxu0 0.0
    %1165 = vmatpush1.msra.mxu0 %v1129
    %1166 = vmatprep.subr.mxu0 0.0
    %1167 = vmatpush1.msra.mxu0 %v1128
    %1168 = vmatprep.subr.mxu0 0.0
    %1169 = vmatpush1.msra.mxu0 %v1127
    %1170 = vmatprep.subr.mxu0 0.0
    %1171 = vmatpush1.msra.mxu0 %v1126
    %1172 = vmatprep.subr.mxu0 0.0
    %1173 = vmatpush1.msra.mxu0 %v1125
    %1174 = vmatprep.subr.mxu0 0.0
    %1175 = vmatpush1.msra.mxu0 %v1124
    %1176 = vmatprep.subr.mxu0 0.0
    %1177 = vmatpush1.msra.mxu0 %v1123
    %1178 = vmatprep.subr.mxu0 0.0
    %1179 = vmatpush2.msra.mxu0 0.0
    %1180 = vmatprep.subr.mxu0 0.0
    %1181 = vmatpush2.msra.mxu0 0.0
    %1182 = vmatprep.subr.mxu0 0.0
    %1183 = vmatpush2.msra.mxu0 0.0
    %1184 = vmatprep.subr.mxu0 0.0
    %1185 = vmatpush2.msra.mxu0 0.0
    %1186 = vmatprep.subr.mxu0 0.0
    %1187 = vmatpush2.msra.mxu0 0.0
    %1188 = vmatprep.subr.mxu0 0.0
    %1189 = vmatpush2.msra.mxu0 0.0
    %1190 = vmatprep.subr.mxu0 0.0
    %1191 = vmatpush2.msra.mxu0 0.0
    %1192 = vmatprep.subr.mxu0 0.0
    %1193 = vmatpush2.msra.mxu0 0.0
    %1194 = vmatprep.subr.mxu0 0.0
    %1195 = vmatpush2.msra.mxu0 0.0
    %1196 = vmatprep.subr.mxu0 0.0
    %1197 = vmatpush2.msra.mxu0 0.0
    %1198 = vmatprep.subr.mxu0 0.0
    %1199 = vmatpush2.msra.mxu0 0.0
    %1200 = vmatprep.subr.mxu0 0.0
    %1201 = vmatpush2.msra.mxu0 0.0
    %1202 = vmatprep.subr.mxu0 0.0
    %1203 = vmatpush2.msra.mxu0 0.0
    %1204 = vmatprep.subr.mxu0 0.0
    %1205 = vmatpush2.msra.mxu0 0.0
    %1206 = vmatprep.subr.mxu0 0.0
    %1207 = vmatpush2.msra.mxu0 0.0
    %1208 = vmatprep.subr.mxu0 0.0
    %1209 = vmatpush2.msra.mxu0 0.0
    %1210 = vmatprep.mubr.f32.mxu0 0.0
    %1211 = vmatmul.mubr.f32.gmra.mxu0 %v1122
    %v1212 = vpop.f32.mrf.mxu0
    %v1213 = vadd.f32 %v1144, %v1212
    %v1214 = vpop.f32.mrf.mxu0
    %1215 = vdwg.mxu0
    %v1216 = vlaneseq
    %v1217 = vshrl.u32 %v1216, 7
    %vm1218 = vcmp.lt.s32.totalorder %v1217, 4
    %v1219 = vsel %vm1218, %v1213, 0.0
    %v1220 = vrot.slane %v1219, 4
    %v1221 = vadd.f32 %v1219, %v1220
    %v1222 = vrot.slane %v1221, 2
    %v1223 = vadd.f32 %v1221, %v1222
    %v1224 = vrot.slane %v1223, 1
    %v1225 = vadd.f32 %v1223, %v1224
    %v1226 = vld [vmem:[#allocation7 + $0x48] sm:$0xff]
    %v1227 = vld [vmem:[#allocation7 + $0xa0] sm:$0xff]
    %v1228 = vld [vmem:[#allocation7 + $0xf8] sm:$0xff]
    %v1229 = vld [vmem:[#allocation7 + $0x150] sm:$0xff]
    %v1230 = vld [vmem:[#allocation7 + $0x1a8] sm:$0xff]
    %v1231 = vld [vmem:[#allocation7 + $0x200] sm:$0xff]
    %v1232 = vld [vmem:[#allocation7 + $0x258] sm:$0xff]
    %v1233 = vld [vmem:[#allocation7 + $0x2b0] sm:$0xff]
    %v1234 = vld [vmem:[#allocation7 + $0x308] sm:$0xff]
    %v1235 = vld [vmem:[#allocation7 + $0x360] sm:$0xff]
    %v1236 = vld [vmem:[#allocation7 + $0x3b8] sm:$0xff]
    %v1237 = vld [vmem:[#allocation7 + $0x410] sm:$0xff]
    %v1238 = vld [vmem:[#allocation7 + $0x468] sm:$0xff]
    %v1239 = vld [vmem:[#allocation7 + $0x4c0] sm:$0xff]
    %v1240 = vld [vmem:[#allocation7 + $0x518] sm:$0xff]
    %v1241 = vld [vmem:[#allocation7 + $0x570] sm:$0xff]
    %v1242 = vld [vmem:[#allocation8 + $0x9] sm:$0x1]
    %1243 = vmatprep.subr.mxu0 0.0
    %1244 = vmatpush1.msra.mxu0 %v1241
    %1245 = vmatprep.subr.mxu0 0.0
    %1246 = vmatpush1.msra.mxu0 %v1240
    %1247 = vmatprep.subr.mxu0 0.0
    %1248 = vmatpush1.msra.mxu0 %v1239
    %1249 = vmatprep.subr.mxu0 0.0
    %1250 = vmatpush1.msra.mxu0 %v1238
    %1251 = vmatprep.subr.mxu0 0.0
    %1252 = vmatpush1.msra.mxu0 %v1237
    %1253 = vmatprep.subr.mxu0 0.0
    %1254 = vmatpush1.msra.mxu0 %v1236
    %1255 = vmatprep.subr.mxu0 0.0
    %1256 = vmatpush1.msra.mxu0 %v1235
    %1257 = vmatprep.subr.mxu0 0.0
    %1258 = vmatpush1.msra.mxu0 %v1234
    %1259 = vmatprep.subr.mxu0 0.0
    %1260 = vmatpush1.msra.mxu0 %v1233
    %1261 = vmatprep.subr.mxu0 0.0
    %1262 = vmatpush1.msra.mxu0 %v1232
    %1263 = vmatprep.subr.mxu0 0.0
    %1264 = vmatpush1.msra.mxu0 %v1231
    %1265 = vmatprep.subr.mxu0 0.0
    %1266 = vmatpush1.msra.mxu0 %v1230
    %1267 = vmatprep.subr.mxu0 0.0
    %1268 = vmatpush1.msra.mxu0 %v1229
    %1269 = vmatprep.subr.mxu0 0.0
    %1270 = vmatpush1.msra.mxu0 %v1228
    %1271 = vmatprep.subr.mxu0 0.0
    %1272 = vmatpush1.msra.mxu0 %v1227
    %1273 = vmatprep.subr.mxu0 0.0
    %1274 = vmatpush1.msra.mxu0 %v1226
    %1275 = vmatprep.subr.mxu0 0.0
    %1276 = vmatpush2.msra.mxu0 0.0
    %1277 = vmatprep.subr.mxu0 0.0
    %1278 = vmatpush2.msra.mxu0 0.0
    %1279 = vmatprep.subr.mxu0 0.0
    %1280 = vmatpush2.msra.mxu0 0.0
    %1281 = vmatprep.subr.mxu0 0.0
    %1282 = vmatpush2.msra.mxu0 0.0
    %1283 = vmatprep.subr.mxu0 0.0
    %1284 = vmatpush2.msra.mxu0 0.0
    %1285 = vmatprep.subr.mxu0 0.0
    %1286 = vmatpush2.msra.mxu0 0.0
    %1287 = vmatprep.subr.mxu0 0.0
    %1288 = vmatpush2.msra.mxu0 0.0
    %1289 = vmatprep.subr.mxu0 0.0
    %1290 = vmatpush2.msra.mxu0 0.0
    %1291 = vmatprep.subr.mxu0 0.0
    %1292 = vmatpush2.msra.mxu0 0.0
    %1293 = vmatprep.subr.mxu0 0.0
    %1294 = vmatpush2.msra.mxu0 0.0
    %1295 = vmatprep.subr.mxu0 0.0
    %1296 = vmatpush2.msra.mxu0 0.0
    %1297 = vmatprep.subr.mxu0 0.0
    %1298 = vmatpush2.msra.mxu0 0.0
    %1299 = vmatprep.subr.mxu0 0.0
    %1300 = vmatpush2.msra.mxu0 0.0
    %1301 = vmatprep.subr.mxu0 0.0
    %1302 = vmatpush2.msra.mxu0 0.0
    %1303 = vmatprep.subr.mxu0 0.0
    %1304 = vmatpush2.msra.mxu0 0.0
    %1305 = vmatprep.subr.mxu0 0.0
    %1306 = vmatpush2.msra.mxu0 0.0
    %1307 = vmatprep.mubr.f32.mxu0 0.0
    %1308 = vmatmul.mubr.f32.gmra.mxu0 %v1225
    %v1309 = vpop.f32.mrf.mxu0
    %v1310 = vadd.f32 %v1242, %v1309
    %v1311 = vpop.f32.mrf.mxu0
    %1312 = vdwg.mxu0
    %vm1313 = vcmp.gt.f32.partialorder %v1310, 0.0
    %v1314 = vmul.f32 %v1310, 0.01
    %v1315 = vsel %vm1313, %v1310, %v1314
    %v1316 = vld [vmem:[#allocation7 + $0x50] sm:$0xff]
    %v1317 = vld [vmem:[#allocation7 + $0xa8] sm:$0xff]
    %v1318 = vld [vmem:[#allocation7 + $0x100] sm:$0xff]
    %v1319 = vld [vmem:[#allocation7 + $0x158] sm:$0xff]
    %v1320 = vld [vmem:[#allocation7 + $0x1b0] sm:$0xff]
    %v1321 = vld [vmem:[#allocation7 + $0x208] sm:$0xff]
    %v1322 = vld [vmem:[#allocation7 + $0x260] sm:$0xff]
    %v1323 = vld [vmem:[#allocation7 + $0x2b8] sm:$0xff]
    %v1324 = vld [vmem:[#allocation7 + $0x310] sm:$0xff]
    %v1325 = vld [vmem:[#allocation7 + $0x368] sm:$0xff]
    %v1326 = vld [vmem:[#allocation7 + $0x3c0] sm:$0xff]
    %v1327 = vld [vmem:[#allocation7 + $0x418] sm:$0xff]
    %v1328 = vld [vmem:[#allocation7 + $0x470] sm:$0xff]
    %v1329 = vld [vmem:[#allocation7 + $0x4c8] sm:$0xff]
    %v1330 = vld [vmem:[#allocation7 + $0x520] sm:$0xff]
    %v1331 = vld [vmem:[#allocation7 + $0x578] sm:$0xff]
    %v1332 = vld [vmem:[#allocation8 + $0xa] sm:$0x1]
    %1333 = vmatprep.subr.mxu0 0.0
    %1334 = vmatpush1.msra.mxu0 %v1331
    %1335 = vmatprep.subr.mxu0 0.0
    %1336 = vmatpush1.msra.mxu0 %v1330
    %1337 = vmatprep.subr.mxu0 0.0
    %1338 = vmatpush1.msra.mxu0 %v1329
    %1339 = vmatprep.subr.mxu0 0.0
    %1340 = vmatpush1.msra.mxu0 %v1328
    %1341 = vmatprep.subr.mxu0 0.0
    %1342 = vmatpush1.msra.mxu0 %v1327
    %1343 = vmatprep.subr.mxu0 0.0
    %1344 = vmatpush1.msra.mxu0 %v1326
    %1345 = vmatprep.subr.mxu0 0.0
    %1346 = vmatpush1.msra.mxu0 %v1325
    %1347 = vmatprep.subr.mxu0 0.0
    %1348 = vmatpush1.msra.mxu0 %v1324
    %1349 = vmatprep.subr.mxu0 0.0
    %1350 = vmatpush1.msra.mxu0 %v1323
    %1351 = vmatprep.subr.mxu0 0.0
    %1352 = vmatpush1.msra.mxu0 %v1322
    %1353 = vmatprep.subr.mxu0 0.0
    %1354 = vmatpush1.msra.mxu0 %v1321
    %1355 = vmatprep.subr.mxu0 0.0
    %1356 = vmatpush1.msra.mxu0 %v1320
    %1357 = vmatprep.subr.mxu0 0.0
    %1358 = vmatpush1.msra.mxu0 %v1319
    %1359 = vmatprep.subr.mxu0 0.0
    %1360 = vmatpush1.msra.mxu0 %v1318
    %1361 = vmatprep.subr.mxu0 0.0
    %1362 = vmatpush1.msra.mxu0 %v1317
    %1363 = vmatprep.subr.mxu0 0.0
    %1364 = vmatpush1.msra.mxu0 %v1316
    %1365 = vmatprep.subr.mxu0 0.0
    %1366 = vmatpush2.msra.mxu0 0.0
    %1367 = vmatprep.subr.mxu0 0.0
    %1368 = vmatpush2.msra.mxu0 0.0
    %1369 = vmatprep.subr.mxu0 0.0
    %1370 = vmatpush2.msra.mxu0 0.0
    %1371 = vmatprep.subr.mxu0 0.0
    %1372 = vmatpush2.msra.mxu0 0.0
    %1373 = vmatprep.subr.mxu0 0.0
    %1374 = vmatpush2.msra.mxu0 0.0
    %1375 = vmatprep.subr.mxu0 0.0
    %1376 = vmatpush2.msra.mxu0 0.0
    %1377 = vmatprep.subr.mxu0 0.0
    %1378 = vmatpush2.msra.mxu0 0.0
    %1379 = vmatprep.subr.mxu0 0.0
    %1380 = vmatpush2.msra.mxu0 0.0
    %1381 = vmatprep.subr.mxu0 0.0
    %1382 = vmatpush2.msra.mxu0 0.0
    %1383 = vmatprep.subr.mxu0 0.0
    %1384 = vmatpush2.msra.mxu0 0.0
    %1385 = vmatprep.subr.mxu0 0.0
    %1386 = vmatpush2.msra.mxu0 0.0
    %1387 = vmatprep.subr.mxu0 0.0
    %1388 = vmatpush2.msra.mxu0 0.0
    %1389 = vmatprep.subr.mxu0 0.0
    %1390 = vmatpush2.msra.mxu0 0.0
    %1391 = vmatprep.subr.mxu0 0.0
    %1392 = vmatpush2.msra.mxu0 0.0
    %1393 = vmatprep.subr.mxu0 0.0
    %1394 = vmatpush2.msra.mxu0 0.0
    %1395 = vmatprep.subr.mxu0 0.0
    %1396 = vmatpush2.msra.mxu0 0.0
    %1397 = vmatprep.mubr.f32.mxu0 0.0
    %1398 = vmatmul.mubr.f32.gmra.mxu0 %v1315
    %v1399 = vpop.f32.mrf.mxu0
    %v1400 = vadd.f32 %v1332, %v1399
    %v1401 = vpop.f32.mrf.mxu0
    %1402 = vdwg.mxu0
    %1403 = vst [vmem:[#allocation10] sm:$0x1] %v1400
    // Predicated region
    $region34: #{tpu_custom_call.1} parent=1 // pred_check
      _
    $region35: #{tpu_custom_call.1} parent=1 // pred_check_branch
      %1405 = sbr.rel (0) target = $region37
    $region36: #{tpu_custom_call.1} parent=1 // pred_region
      %s1407 = ssub.s32 16, 16
      %1408 = vsyncadd [#allocation4], %s1407
      %s1410 = sshll.u32 [#allocation10], 4
      %s1411 = int_to_ptr.vmem [resolvable:$true] %s1410
      %1413 = dma.vmem_to_hbm [thread:$0]  %s1411, 16, %s4, [#allocation4]
    $region37: #{tpu_custom_call.1} parent=1 // pred_fallthru
      _
    // Predicated region
    $region38: #{tpu_custom_call.1} parent=1 // pred_check
      _
    $region39: #{tpu_custom_call.1} parent=1 // pred_check_branch
      %1415 = sbr.rel (0) target = $region41
    $region40: #{tpu_custom_call.1} parent=1 // pred_region
      %1416 = dma.done [#allocation4], 16
    $region41: #{tpu_custom_call.1} parent=1 // pred_fallthru
      _
    %1417 = vsyncpa [#allocation3], 1
    %1418 = vsyncpa [#allocation6], 1
    %1419 = vsyncpa [#allocation9], 1
    %1420 = vsyncpa [#allocation4], 1

</llo_original>
